<compile_context>
chip_gen: v5e
topology: v5e:2x2
jax: 0.10.0
libtpu: 0.0.40
codegen_flags: <defaults>
</compile_context>

<pallas_src>
import functools

import jax
import jax.numpy as jnp
import numpy as np
from jax.experimental import pallas as pl
from jax.experimental.pallas import tpu as pltpu

NEG_SLOPE = 0.01  # F.leaky_relu default negative_slope


def _leaky(v):
    return jnp.where(v > 0, v, NEG_SLOPE * v)


def _cls_kernel(Wimg,
                x_ref, mask_ref,
                w1_ref, b1_ref, w2_ref, b2_ref, w3_ref, b3_ref,
                w4_ref, b4_ref,
                wl1_ref, bl1_ref, wl2_ref, bl2_ref, wl3_ref, bl3_ref,
                out_ref):
    x = x_ref[0]                                  # (Cin, HW)

    # Boundary masks (depend only on H, W): load the 9 rows once, reuse for
    # all three 3x3 convs.
    mrows = [mask_ref[pl.ds(t, 1), :] for t in range(9)]   # each (1, HW)

    # conv1 (1x1) == channel-mixing matmul in the (C, HW) layout.
    a = _leaky(jnp.dot(w1_ref[...], x, preferred_element_type=jnp.float32)
               + b1_ref[...])                     # (16, HW); rows 12..15 == 0

    def conv3x3(act_in, w_ref, b_ref):
        # im2col: 9 lane-shifted + masked copies stacked on the (aligned,
        # padded-to-16) channel axis -> a single K = 9*16 = 144 MXU matmul.
        n = act_in.shape[1]
        cols = []
        for ky in range(3):
            for kx in range(3):
                d = (ky - 1) * Wimg + (kx - 1)    # flat shift of this tap
                if d == 0:
                    shifted = act_in
                else:
                    # want shifted[:, p] == act_in[:, p + d]; wrap is masked.
                    shifted = pltpu.roll(act_in, (-d) % n, 1)
                cols.append(shifted * mrows[ky * 3 + kx])
        im2col = jnp.concatenate(cols, axis=0)    # (144, HW), tile-aligned
        return (jnp.dot(w_ref[...], im2col,
                        preferred_element_type=jnp.float32) + b_ref[...])

    a = _leaky(conv3x3(a, w2_ref, b2_ref))                      # (16, HW)
    a = _leaky(conv3x3(a, w3_ref, b3_ref))                      # (16, HW)
    f = jnp.maximum(conv3x3(a, w4_ref, b4_ref), 0.0)            # (1, HW)

    # ---- flatten + MLP head (row-vector form, pre-transposed weights) ----
    h = jnp.maximum(
        jnp.dot(f, wl1_ref[...], preferred_element_type=jnp.float32)
        + bl1_ref[...], 0.0)                                    # (1, hidden)
    h = jnp.maximum(
        jnp.dot(h, wl2_ref[...], preferred_element_type=jnp.float32)
        + bl2_ref[...], 0.0)                                    # (1, hidden//2)
    h = jax.nn.sigmoid(
        jnp.dot(h, wl3_ref[...], preferred_element_type=jnp.float32)
        + bl3_ref[...])                                         # (1, label)
    out_ref[...] = h.reshape(out_ref.shape)                     # (1, 1, label)


def cls_forward(x_nchw, params):
    B, Cin, H, W = x_nchw.shape
    HW = H * W
    label = params["wl3"].shape[0]
    c1out = params["w1"].shape[1]                 # 12
    CP = ((c1out + 7) // 8) * 8                   # channels padded to 16

    # Flatten order of the head only matches torch's C-major flatten because
    # conv4 has a single output channel.
    assert params["w4"].shape[-1] == 1, "flatten order requires conv4 Cout==1"
    assert params["wl1"].shape[1] == HW, "linear1 in_features must equal H*W"

    # channels-on-sublane / HW-on-lane layout: pure reshape, no transpose.
    x2 = x_nchw.reshape(B, Cin, HW)

    # 9 boundary masks (one per 3x3 tap), shared by conv2/conv3/conv4.
    hh = np.arange(H)[:, None]
    ww = np.arange(W)[None, :]
    mask_list = []
    for ky in range(3):
        for kx in range(3):
            dy, dx = ky - 1, kx - 1
            valid = ((hh + dy >= 0) & (hh + dy < H) &
                     (ww + dx >= 0) & (ww + dx < W))             # (H, W)
            mask_list.append(np.asarray(valid, np.float32).reshape(HW))
    masks = jnp.asarray(np.stack(mask_list))                     # (9, HW)

    # conv1 weights -> (CP, Cin) with zero-padded output channels.
    w1p = jnp.zeros((CP, Cin), jnp.float32).at[:c1out, :].set(params["w1"].T)
    b1p = jnp.zeros((CP, 1), jnp.float32).at[:c1out, 0].set(params["b1"])

    def prep3x3(w_hwio, b, cout_pad):
        # (3,3,cin,cout) HWIO -> (cout_pad, 9*CP), tap-major then channel,
        # matching the in-kernel im2col stacking order; pads are zero.
        cout, cin = w_hwio.shape[3], w_hwio.shape[2]
        w = jnp.transpose(w_hwio, (3, 0, 1, 2))                  # (cout,3,3,cin)
        wp = jnp.zeros((cout_pad, 3, 3, CP), jnp.float32)
        wp = wp.at[:cout, :, :, :cin].set(w)
        bp = jnp.zeros((cout_pad, 1), jnp.float32).at[:cout, 0].set(b)
        return wp.reshape(cout_pad, 9 * CP), bp

    w2p, b2p = prep3x3(params["w2"], params["b2"], CP)
    w3p, b3p = prep3x3(params["w3"], params["b3"], CP)
    w4p, b4p = prep3x3(params["w4"], params["b4"], params["w4"].shape[3])

    args = [
        x2, masks,
        w1p, b1p, w2p, b2p, w3p, b3p, w4p, b4p,
        params["wl1"].T, params["bl1"].reshape(1, -1),
        params["wl2"].T, params["bl2"].reshape(1, -1),
        params["wl3"].T, params["bl3"].reshape(1, -1),
    ]

    in_specs = [pl.BlockSpec((1, Cin, HW), lambda b: (b, 0, 0))]
    for a in args[1:]:
        # full-array blocks with constant index maps: stay VMEM-resident
        # across grid steps (no per-step re-DMA).
        in_specs.append(pl.BlockSpec(a.shape, lambda b, nd=a.ndim: (0,) * nd))

    out = pl.pallas_call(
        functools.partial(_cls_kernel, W),
        out_shape=jax.ShapeDtypeStruct((B, 1, label), jnp.float32),
        grid=(B,),
        in_specs=in_specs,
        out_specs=pl.BlockSpec((1, 1, label), lambda b: (b, 0, 0)),
        compiler_params=pltpu.CompilerParams(
            dimension_semantics=("parallel",)),
    )(*args)

    out = out.reshape(B, label)
    # matches torch `x.squeeze(1)`: drops dim 1 only if it is size 1
    return jnp.squeeze(out, axis=1) if label == 1 else out


# -------------------- pure-JAX reference (for verification) -----------------
def ref_forward(x, p):
    def conv(v, w_hwio, b, pad):
        y = jax.lax.conv_general_dilated(
            v, w_hwio, (1, 1), pad,
            dimension_numbers=("NCHW", "HWIO", "NCHW"))
        return y + b.reshape(1, -1, 1, 1)

    a = _leaky(conv(x, p["w1"].reshape(1, 1, *p["w1"].shape), p["b1"],
                    [(0, 0), (0, 0)]))
    a = _leaky(conv(a, p["w2"], p["b2"], [(1, 1), (1, 1)]))
    a = _leaky(conv(a, p["w3"], p["b3"], [(1, 1), (1, 1)]))
    a = jnp.maximum(conv(a, p["w4"], p["b4"], [(1, 1), (1, 1)]), 0.0)
    flat = a.reshape(a.shape[0], -1)
    h = jnp.maximum(flat @ p["wl1"].T + p["bl1"], 0.0)
    h = jnp.maximum(h @ p["wl2"].T + p["bl2"], 0.0)
    h = jax.nn.sigmoid(h @ p["wl3"].T + p["bl3"])
    return jnp.squeeze(h, axis=1) if h.shape[1] == 1 else h


# -------------------- deterministic parameter init ---------------------------
def init_params(key, cnn_channel=3, cnn_reshape=16, hidden=32, label=1):
    ks = jax.random.split(key, 14)

    def rnd(k, shape, fan_in):
        return (jax.random.normal(k, shape, jnp.float32)
                / np.float32(np.sqrt(fan_in)))

    p = {}
    p["w1"] = rnd(ks[0], (cnn_channel, 12), cnn_channel)        # 1x1 conv (Cin, Cout)
    p["b1"] = rnd(ks[1], (12,), 12)
    p["w2"] = rnd(ks[2], (3, 3, 12, 12), 9 * 12)                # HWIO
    p["b2"] = rnd(ks[3], (12,), 12)
    p["w3"] = rnd(ks[4], (3, 3, 12, 12), 9 * 12)
    p["b3"] = rnd(ks[5], (12,), 12)
    p["w4"] = rnd(ks[6], (3, 3, 12, 1), 9 * 12)
    p["b4"] = rnd(ks[7], (1,), 1)
    p["wl1"] = rnd(ks[8], (hidden, cnn_reshape ** 2), cnn_reshape ** 2)  # (out, in)
    p["bl1"] = rnd(ks[9], (hidden,), hidden)
    p["wl2"] = rnd(ks[10], (hidden // 2, hidden), hidden)
    p["bl2"] = rnd(ks[11], (hidden // 2,), hidden)
    p["wl3"] = rnd(ks[12], (label, hidden // 2), hidden // 2)
    p["bl3"] = rnd(ks[13], (label,), label)
    return p


if __name__ == "__main__":
    key = jax.random.PRNGKey(0)
    kx, kp = jax.random.split(key)

    # CLS(hidden_channels=32, label_size=1, cnn_channel=3, cnn_reshape=16)
    B, Cin, H, W = 2, 3, 16, 16
    hidden, label = 32, 1

    x = jax.random.normal(kx, (B, Cin, H, W), jnp.float32)
    params = init_params(kp, cnn_channel=Cin, cnn_reshape=H,
                         hidden=hidden, label=label)

    out = cls_forward(x, params)
    out = jax.block_until_ready(out)

    ref = ref_forward(x, params)
    np.testing.assert_allclose(np.asarray(out), np.asarray(ref),
                               rtol=1e-3, atol=1e-4)
    print("KERNEL_OK")
</pallas_src>

<mosaic_0001>
module attributes {stable_mosaic.version = 11 : i64} {
  func.func @_cls_kernel(%arg0: i32, %arg1: memref<1x3x256xf32, #tpu.memory_space<vmem>>, %arg2: memref<9x256xf32, #tpu.memory_space<vmem>>, %arg3: memref<16x3xf32, #tpu.memory_space<vmem>>, %arg4: memref<16x1xf32, #tpu.memory_space<vmem>>, %arg5: memref<16x144xf32, #tpu.memory_space<vmem>>, %arg6: memref<16x1xf32, #tpu.memory_space<vmem>>, %arg7: memref<16x144xf32, #tpu.memory_space<vmem>>, %arg8: memref<16x1xf32, #tpu.memory_space<vmem>>, %arg9: memref<1x144xf32, #tpu.memory_space<vmem>>, %arg10: memref<1x1xf32, #tpu.memory_space<vmem>>, %arg11: memref<256x32xf32, #tpu.memory_space<vmem>>, %arg12: memref<1x32xf32, #tpu.memory_space<vmem>>, %arg13: memref<32x16xf32, #tpu.memory_space<vmem>>, %arg14: memref<1x16xf32, #tpu.memory_space<vmem>>, %arg15: memref<16x1xf32, #tpu.memory_space<vmem>>, %arg16: memref<1x1xf32, #tpu.memory_space<vmem>>, %arg17: memref<1x1x1xf32, #tpu.memory_space<vmem>>) attributes {dimension_semantics = [#tpu.dimension_semantics<parallel>], iteration_bounds = array<i64: 2>, scalar_prefetch = 0 : i64, scratch_operands = 0 : i64, tpu.core_type = #tpu.core_type<tc>, window_params = [{transform_indices = @transform_0, window_bounds = array<i64: 1, 3, 256>}, {pipeline_mode = #tpu.pipeline_mode<synchronous>, transform_indices = @transform_1, window_bounds = array<i64: 9, 256>}, {pipeline_mode = #tpu.pipeline_mode<synchronous>, transform_indices = @transform_2, window_bounds = array<i64: 16, 3>}, {pipeline_mode = #tpu.pipeline_mode<synchronous>, transform_indices = @transform_3, window_bounds = array<i64: 16, 1>}, {pipeline_mode = #tpu.pipeline_mode<synchronous>, transform_indices = @transform_4, window_bounds = array<i64: 16, 144>}, {pipeline_mode = #tpu.pipeline_mode<synchronous>, transform_indices = @transform_5, window_bounds = array<i64: 16, 1>}, {pipeline_mode = #tpu.pipeline_mode<synchronous>, transform_indices = @transform_6, window_bounds = array<i64: 16, 144>}, {pipeline_mode = #tpu.pipeline_mode<synchronous>, transform_indices = @transform_7, window_bounds = array<i64: 16, 1>}, {pipeline_mode = #tpu.pipeline_mode<synchronous>, transform_indices = @transform_8, window_bounds = array<i64: 1, 144>}, {pipeline_mode = #tpu.pipeline_mode<synchronous>, transform_indices = @transform_9, window_bounds = array<i64: 1, 1>}, {pipeline_mode = #tpu.pipeline_mode<synchronous>, transform_indices = @transform_10, window_bounds = array<i64: 256, 32>}, {pipeline_mode = #tpu.pipeline_mode<synchronous>, transform_indices = @transform_11, window_bounds = array<i64: 1, 32>}, {pipeline_mode = #tpu.pipeline_mode<synchronous>, transform_indices = @transform_12, window_bounds = array<i64: 32, 16>}, {pipeline_mode = #tpu.pipeline_mode<synchronous>, transform_indices = @transform_13, window_bounds = array<i64: 1, 16>}, {pipeline_mode = #tpu.pipeline_mode<synchronous>, transform_indices = @transform_14, window_bounds = array<i64: 16, 1>}, {pipeline_mode = #tpu.pipeline_mode<synchronous>, transform_indices = @transform_15, window_bounds = array<i64: 1, 1>}, {transform_indices = @transform_16, window_bounds = array<i64: 1, 1, 1>}]} {
    %c0 = arith.constant 0 : index
    %c0_0 = arith.constant 0 : index
    %c0_1 = arith.constant 0 : index
    %0 = vector.load %arg1[%c0, %c0_0, %c0_1] : memref<1x3x256xf32, #tpu.memory_space<vmem>>, vector<1x3x256xf32>
    %1 = vector.shape_cast %0 : vector<1x3x256xf32> to vector<3x256xf32>
    %c0_2 = arith.constant 0 : index
    %c0_3 = arith.constant 0 : index
    %2 = vector.load %arg2[%c0_2, %c0_3] : memref<9x256xf32, #tpu.memory_space<vmem>>, vector<1x256xf32>
    %c1 = arith.constant 1 : index
    %c0_4 = arith.constant 0 : index
    %3 = vector.load %arg2[%c1, %c0_4] : memref<9x256xf32, #tpu.memory_space<vmem>>, vector<1x256xf32>
    %c2 = arith.constant 2 : index
    %c0_5 = arith.constant 0 : index
    %4 = vector.load %arg2[%c2, %c0_5] : memref<9x256xf32, #tpu.memory_space<vmem>>, vector<1x256xf32>
    %c3 = arith.constant 3 : index
    %c0_6 = arith.constant 0 : index
    %5 = vector.load %arg2[%c3, %c0_6] : memref<9x256xf32, #tpu.memory_space<vmem>>, vector<1x256xf32>
    %c4 = arith.constant 4 : index
    %c0_7 = arith.constant 0 : index
    %6 = vector.load %arg2[%c4, %c0_7] : memref<9x256xf32, #tpu.memory_space<vmem>>, vector<1x256xf32>
    %c5 = arith.constant 5 : index
    %c0_8 = arith.constant 0 : index
    %7 = vector.load %arg2[%c5, %c0_8] : memref<9x256xf32, #tpu.memory_space<vmem>>, vector<1x256xf32>
    %c6 = arith.constant 6 : index
    %c0_9 = arith.constant 0 : index
    %8 = vector.load %arg2[%c6, %c0_9] : memref<9x256xf32, #tpu.memory_space<vmem>>, vector<1x256xf32>
    %c7 = arith.constant 7 : index
    %c0_10 = arith.constant 0 : index
    %9 = vector.load %arg2[%c7, %c0_10] : memref<9x256xf32, #tpu.memory_space<vmem>>, vector<1x256xf32>
    %c8 = arith.constant 8 : index
    %c0_11 = arith.constant 0 : index
    %10 = vector.load %arg2[%c8, %c0_11] : memref<9x256xf32, #tpu.memory_space<vmem>>, vector<1x256xf32>
    %c0_12 = arith.constant 0 : index
    %c0_13 = arith.constant 0 : index
    %11 = vector.load %arg3[%c0_12, %c0_13] : memref<16x3xf32, #tpu.memory_space<vmem>>, vector<16x3xf32>
    %cst = arith.constant dense<0.000000e+00> : vector<16x256xf32>
    %12 = tpu.matmul %11, %1, %cst {dimension_numbers = #tpu.dot_dimension_numbers<[1], [0], [0], [1], [0, 0, 1, 1], [], []>} : vector<16x3xf32>, vector<3x256xf32>, vector<16x256xf32> -> vector<16x256xf32>
    %c0_14 = arith.constant 0 : index
    %c0_15 = arith.constant 0 : index
    %13 = vector.load %arg4[%c0_14, %c0_15] : memref<16x1xf32, #tpu.memory_space<vmem>>, vector<16x1xf32>
    %14 = vector.broadcast %13 : vector<16x1xf32> to vector<16x256xf32>
    %15 = arith.addf %12, %14 : vector<16x256xf32>
    %cst_16 = arith.constant 0.000000e+00 : f32
    %16 = vector.broadcast %cst_16 : f32 to vector<16x256xf32>
    %17 = arith.cmpf ogt, %15, %16 : vector<16x256xf32>
    %cst_17 = arith.constant 0.00999999977 : f32
    %18 = vector.broadcast %cst_17 : f32 to vector<16x256xf32>
    %19 = arith.mulf %18, %15 : vector<16x256xf32>
    %20 = arith.select %17, %15, %19 : vector<16x256xi1>, vector<16x256xf32>
    %c17_i32 = arith.constant 17 : i32
    %21 = tpu.dynamic_rotate %20 by %c17_i32 dim 1 : vector<16x256xf32>, i32 -> vector<16x256xf32>
    %22 = vector.broadcast %2 : vector<1x256xf32> to vector<16x256xf32>
    %23 = arith.mulf %21, %22 : vector<16x256xf32>
    %c16_i32 = arith.constant 16 : i32
    %24 = tpu.dynamic_rotate %20 by %c16_i32 dim 1 : vector<16x256xf32>, i32 -> vector<16x256xf32>
    %25 = vector.broadcast %3 : vector<1x256xf32> to vector<16x256xf32>
    %26 = arith.mulf %24, %25 : vector<16x256xf32>
    %c15_i32 = arith.constant 15 : i32
    %27 = tpu.dynamic_rotate %20 by %c15_i32 dim 1 : vector<16x256xf32>, i32 -> vector<16x256xf32>
    %28 = vector.broadcast %4 : vector<1x256xf32> to vector<16x256xf32>
    %29 = arith.mulf %27, %28 : vector<16x256xf32>
    %c1_i32 = arith.constant 1 : i32
    %30 = tpu.dynamic_rotate %20 by %c1_i32 dim 1 : vector<16x256xf32>, i32 -> vector<16x256xf32>
    %31 = vector.broadcast %5 : vector<1x256xf32> to vector<16x256xf32>
    %32 = arith.mulf %30, %31 : vector<16x256xf32>
    %33 = vector.broadcast %6 : vector<1x256xf32> to vector<16x256xf32>
    %34 = arith.mulf %20, %33 : vector<16x256xf32>
    %c255_i32 = arith.constant 255 : i32
    %35 = tpu.dynamic_rotate %20 by %c255_i32 dim 1 : vector<16x256xf32>, i32 -> vector<16x256xf32>
    %36 = vector.broadcast %7 : vector<1x256xf32> to vector<16x256xf32>
    %37 = arith.mulf %35, %36 : vector<16x256xf32>
    %c241_i32 = arith.constant 241 : i32
    %38 = tpu.dynamic_rotate %20 by %c241_i32 dim 1 : vector<16x256xf32>, i32 -> vector<16x256xf32>
    %39 = vector.broadcast %8 : vector<1x256xf32> to vector<16x256xf32>
    %40 = arith.mulf %38, %39 : vector<16x256xf32>
    %c240_i32 = arith.constant 240 : i32
    %41 = tpu.dynamic_rotate %20 by %c240_i32 dim 1 : vector<16x256xf32>, i32 -> vector<16x256xf32>
    %42 = vector.broadcast %9 : vector<1x256xf32> to vector<16x256xf32>
    %43 = arith.mulf %41, %42 : vector<16x256xf32>
    %c239_i32 = arith.constant 239 : i32
    %44 = tpu.dynamic_rotate %20 by %c239_i32 dim 1 : vector<16x256xf32>, i32 -> vector<16x256xf32>
    %45 = vector.broadcast %10 : vector<1x256xf32> to vector<16x256xf32>
    %46 = arith.mulf %44, %45 : vector<16x256xf32>
    %47 = tpu.concatenate %23, %26, %29, %32, %34, %37, %40, %43, %46 in 0 : vector<16x256xf32>, vector<16x256xf32>, vector<16x256xf32>, vector<16x256xf32>, vector<16x256xf32>, vector<16x256xf32>, vector<16x256xf32>, vector<16x256xf32>, vector<16x256xf32> -> vector<144x256xf32>
    %c0_18 = arith.constant 0 : index
    %c0_19 = arith.constant 0 : index
    %48 = vector.load %arg5[%c0_18, %c0_19] : memref<16x144xf32, #tpu.memory_space<vmem>>, vector<16x144xf32>
    %cst_20 = arith.constant dense<0.000000e+00> : vector<16x256xf32>
    %49 = tpu.matmul %48, %47, %cst_20 {dimension_numbers = #tpu.dot_dimension_numbers<[1], [0], [0], [1], [0, 0, 1, 1], [], []>} : vector<16x144xf32>, vector<144x256xf32>, vector<16x256xf32> -> vector<16x256xf32>
    %c0_21 = arith.constant 0 : index
    %c0_22 = arith.constant 0 : index
    %50 = vector.load %arg6[%c0_21, %c0_22] : memref<16x1xf32, #tpu.memory_space<vmem>>, vector<16x1xf32>
    %51 = vector.broadcast %50 : vector<16x1xf32> to vector<16x256xf32>
    %52 = arith.addf %49, %51 : vector<16x256xf32>
    %cst_23 = arith.constant 0.000000e+00 : f32
    %53 = vector.broadcast %cst_23 : f32 to vector<16x256xf32>
    %54 = arith.cmpf ogt, %52, %53 : vector<16x256xf32>
    %cst_24 = arith.constant 0.00999999977 : f32
    %55 = vector.broadcast %cst_24 : f32 to vector<16x256xf32>
    %56 = arith.mulf %55, %52 : vector<16x256xf32>
    %57 = arith.select %54, %52, %56 : vector<16x256xi1>, vector<16x256xf32>
    %c17_i32_25 = arith.constant 17 : i32
    %58 = tpu.dynamic_rotate %57 by %c17_i32_25 dim 1 : vector<16x256xf32>, i32 -> vector<16x256xf32>
    %59 = vector.broadcast %2 : vector<1x256xf32> to vector<16x256xf32>
    %60 = arith.mulf %58, %59 : vector<16x256xf32>
    %c16_i32_26 = arith.constant 16 : i32
    %61 = tpu.dynamic_rotate %57 by %c16_i32_26 dim 1 : vector<16x256xf32>, i32 -> vector<16x256xf32>
    %62 = vector.broadcast %3 : vector<1x256xf32> to vector<16x256xf32>
    %63 = arith.mulf %61, %62 : vector<16x256xf32>
    %c15_i32_27 = arith.constant 15 : i32
    %64 = tpu.dynamic_rotate %57 by %c15_i32_27 dim 1 : vector<16x256xf32>, i32 -> vector<16x256xf32>
    %65 = vector.broadcast %4 : vector<1x256xf32> to vector<16x256xf32>
    %66 = arith.mulf %64, %65 : vector<16x256xf32>
    %c1_i32_28 = arith.constant 1 : i32
    %67 = tpu.dynamic_rotate %57 by %c1_i32_28 dim 1 : vector<16x256xf32>, i32 -> vector<16x256xf32>
    %68 = vector.broadcast %5 : vector<1x256xf32> to vector<16x256xf32>
    %69 = arith.mulf %67, %68 : vector<16x256xf32>
    %70 = vector.broadcast %6 : vector<1x256xf32> to vector<16x256xf32>
    %71 = arith.mulf %57, %70 : vector<16x256xf32>
    %c255_i32_29 = arith.constant 255 : i32
    %72 = tpu.dynamic_rotate %57 by %c255_i32_29 dim 1 : vector<16x256xf32>, i32 -> vector<16x256xf32>
    %73 = vector.broadcast %7 : vector<1x256xf32> to vector<16x256xf32>
    %74 = arith.mulf %72, %73 : vector<16x256xf32>
    %c241_i32_30 = arith.constant 241 : i32
    %75 = tpu.dynamic_rotate %57 by %c241_i32_30 dim 1 : vector<16x256xf32>, i32 -> vector<16x256xf32>
    %76 = vector.broadcast %8 : vector<1x256xf32> to vector<16x256xf32>
    %77 = arith.mulf %75, %76 : vector<16x256xf32>
    %c240_i32_31 = arith.constant 240 : i32
    %78 = tpu.dynamic_rotate %57 by %c240_i32_31 dim 1 : vector<16x256xf32>, i32 -> vector<16x256xf32>
    %79 = vector.broadcast %9 : vector<1x256xf32> to vector<16x256xf32>
    %80 = arith.mulf %78, %79 : vector<16x256xf32>
    %c239_i32_32 = arith.constant 239 : i32
    %81 = tpu.dynamic_rotate %57 by %c239_i32_32 dim 1 : vector<16x256xf32>, i32 -> vector<16x256xf32>
    %82 = vector.broadcast %10 : vector<1x256xf32> to vector<16x256xf32>
    %83 = arith.mulf %81, %82 : vector<16x256xf32>
    %84 = tpu.concatenate %60, %63, %66, %69, %71, %74, %77, %80, %83 in 0 : vector<16x256xf32>, vector<16x256xf32>, vector<16x256xf32>, vector<16x256xf32>, vector<16x256xf32>, vector<16x256xf32>, vector<16x256xf32>, vector<16x256xf32>, vector<16x256xf32> -> vector<144x256xf32>
    %c0_33 = arith.constant 0 : index
    %c0_34 = arith.constant 0 : index
    %85 = vector.load %arg7[%c0_33, %c0_34] : memref<16x144xf32, #tpu.memory_space<vmem>>, vector<16x144xf32>
    %cst_35 = arith.constant dense<0.000000e+00> : vector<16x256xf32>
    %86 = tpu.matmul %85, %84, %cst_35 {dimension_numbers = #tpu.dot_dimension_numbers<[1], [0], [0], [1], [0, 0, 1, 1], [], []>} : vector<16x144xf32>, vector<144x256xf32>, vector<16x256xf32> -> vector<16x256xf32>
    %c0_36 = arith.constant 0 : index
    %c0_37 = arith.constant 0 : index
    %87 = vector.load %arg8[%c0_36, %c0_37] : memref<16x1xf32, #tpu.memory_space<vmem>>, vector<16x1xf32>
    %88 = vector.broadcast %87 : vector<16x1xf32> to vector<16x256xf32>
    %89 = arith.addf %86, %88 : vector<16x256xf32>
    %cst_38 = arith.constant 0.000000e+00 : f32
    %90 = vector.broadcast %cst_38 : f32 to vector<16x256xf32>
    %91 = arith.cmpf ogt, %89, %90 : vector<16x256xf32>
    %cst_39 = arith.constant 0.00999999977 : f32
    %92 = vector.broadcast %cst_39 : f32 to vector<16x256xf32>
    %93 = arith.mulf %92, %89 : vector<16x256xf32>
    %94 = arith.select %91, %89, %93 : vector<16x256xi1>, vector<16x256xf32>
    %c17_i32_40 = arith.constant 17 : i32
    %95 = tpu.dynamic_rotate %94 by %c17_i32_40 dim 1 : vector<16x256xf32>, i32 -> vector<16x256xf32>
    %96 = vector.broadcast %2 : vector<1x256xf32> to vector<16x256xf32>
    %97 = arith.mulf %95, %96 : vector<16x256xf32>
    %c16_i32_41 = arith.constant 16 : i32
    %98 = tpu.dynamic_rotate %94 by %c16_i32_41 dim 1 : vector<16x256xf32>, i32 -> vector<16x256xf32>
    %99 = vector.broadcast %3 : vector<1x256xf32> to vector<16x256xf32>
    %100 = arith.mulf %98, %99 : vector<16x256xf32>
    %c15_i32_42 = arith.constant 15 : i32
    %101 = tpu.dynamic_rotate %94 by %c15_i32_42 dim 1 : vector<16x256xf32>, i32 -> vector<16x256xf32>
    %102 = vector.broadcast %4 : vector<1x256xf32> to vector<16x256xf32>
    %103 = arith.mulf %101, %102 : vector<16x256xf32>
    %c1_i32_43 = arith.constant 1 : i32
    %104 = tpu.dynamic_rotate %94 by %c1_i32_43 dim 1 : vector<16x256xf32>, i32 -> vector<16x256xf32>
    %105 = vector.broadcast %5 : vector<1x256xf32> to vector<16x256xf32>
    %106 = arith.mulf %104, %105 : vector<16x256xf32>
    %107 = vector.broadcast %6 : vector<1x256xf32> to vector<16x256xf32>
    %108 = arith.mulf %94, %107 : vector<16x256xf32>
    %c255_i32_44 = arith.constant 255 : i32
    %109 = tpu.dynamic_rotate %94 by %c255_i32_44 dim 1 : vector<16x256xf32>, i32 -> vector<16x256xf32>
    %110 = vector.broadcast %7 : vector<1x256xf32> to vector<16x256xf32>
    %111 = arith.mulf %109, %110 : vector<16x256xf32>
    %c241_i32_45 = arith.constant 241 : i32
    %112 = tpu.dynamic_rotate %94 by %c241_i32_45 dim 1 : vector<16x256xf32>, i32 -> vector<16x256xf32>
    %113 = vector.broadcast %8 : vector<1x256xf32> to vector<16x256xf32>
    %114 = arith.mulf %112, %113 : vector<16x256xf32>
    %c240_i32_46 = arith.constant 240 : i32
    %115 = tpu.dynamic_rotate %94 by %c240_i32_46 dim 1 : vector<16x256xf32>, i32 -> vector<16x256xf32>
    %116 = vector.broadcast %9 : vector<1x256xf32> to vector<16x256xf32>
    %117 = arith.mulf %115, %116 : vector<16x256xf32>
    %c239_i32_47 = arith.constant 239 : i32
    %118 = tpu.dynamic_rotate %94 by %c239_i32_47 dim 1 : vector<16x256xf32>, i32 -> vector<16x256xf32>
    %119 = vector.broadcast %10 : vector<1x256xf32> to vector<16x256xf32>
    %120 = arith.mulf %118, %119 : vector<16x256xf32>
    %121 = tpu.concatenate %97, %100, %103, %106, %108, %111, %114, %117, %120 in 0 : vector<16x256xf32>, vector<16x256xf32>, vector<16x256xf32>, vector<16x256xf32>, vector<16x256xf32>, vector<16x256xf32>, vector<16x256xf32>, vector<16x256xf32>, vector<16x256xf32> -> vector<144x256xf32>
    %c0_48 = arith.constant 0 : index
    %c0_49 = arith.constant 0 : index
    %122 = vector.load %arg9[%c0_48, %c0_49] : memref<1x144xf32, #tpu.memory_space<vmem>>, vector<1x144xf32>
    %cst_50 = arith.constant dense<0.000000e+00> : vector<1x256xf32>
    %123 = tpu.matmul %122, %121, %cst_50 {dimension_numbers = #tpu.dot_dimension_numbers<[1], [0], [0], [1], [0, 0, 1, 1], [], []>} : vector<1x144xf32>, vector<144x256xf32>, vector<1x256xf32> -> vector<1x256xf32>
    %c0_51 = arith.constant 0 : index
    %c0_52 = arith.constant 0 : index
    %124 = vector.load %arg10[%c0_51, %c0_52] : memref<1x1xf32, #tpu.memory_space<vmem>>, vector<1x1xf32>
    %125 = vector.broadcast %124 : vector<1x1xf32> to vector<1x256xf32>
    %126 = arith.addf %123, %125 : vector<1x256xf32>
    %cst_53 = arith.constant 0.000000e+00 : f32
    %127 = vector.broadcast %cst_53 : f32 to vector<1x256xf32>
    %128 = arith.maximumf %126, %127 : vector<1x256xf32>
    %c0_54 = arith.constant 0 : index
    %c0_55 = arith.constant 0 : index
    %129 = vector.load %arg11[%c0_54, %c0_55] : memref<256x32xf32, #tpu.memory_space<vmem>>, vector<256x32xf32>
    %cst_56 = arith.constant dense<0.000000e+00> : vector<1x32xf32>
    %130 = tpu.matmul %128, %129, %cst_56 {dimension_numbers = #tpu.dot_dimension_numbers<[1], [0], [0], [1], [0, 0, 1, 1], [], []>} : vector<1x256xf32>, vector<256x32xf32>, vector<1x32xf32> -> vector<1x32xf32>
    %c0_57 = arith.constant 0 : index
    %c0_58 = arith.constant 0 : index
    %131 = vector.load %arg12[%c0_57, %c0_58] : memref<1x32xf32, #tpu.memory_space<vmem>>, vector<1x32xf32>
    %132 = arith.addf %130, %131 : vector<1x32xf32>
    %cst_59 = arith.constant 0.000000e+00 : f32
    %133 = vector.broadcast %cst_59 : f32 to vector<1x32xf32>
    %134 = arith.maximumf %132, %133 : vector<1x32xf32>
    %c0_60 = arith.constant 0 : index
    %c0_61 = arith.constant 0 : index
    %135 = vector.load %arg13[%c0_60, %c0_61] : memref<32x16xf32, #tpu.memory_space<vmem>>, vector<32x16xf32>
    %cst_62 = arith.constant dense<0.000000e+00> : vector<1x16xf32>
    %136 = tpu.matmul %134, %135, %cst_62 {dimension_numbers = #tpu.dot_dimension_numbers<[1], [0], [0], [1], [0, 0, 1, 1], [], []>} : vector<1x32xf32>, vector<32x16xf32>, vector<1x16xf32> -> vector<1x16xf32>
    %c0_63 = arith.constant 0 : index
    %c0_64 = arith.constant 0 : index
    %137 = vector.load %arg14[%c0_63, %c0_64] : memref<1x16xf32, #tpu.memory_space<vmem>>, vector<1x16xf32>
    %138 = arith.addf %136, %137 : vector<1x16xf32>
    %cst_65 = arith.constant 0.000000e+00 : f32
    %139 = vector.broadcast %cst_65 : f32 to vector<1x16xf32>
    %140 = arith.maximumf %138, %139 : vector<1x16xf32>
    %c0_66 = arith.constant 0 : index
    %c0_67 = arith.constant 0 : index
    %141 = vector.load %arg15[%c0_66, %c0_67] : memref<16x1xf32, #tpu.memory_space<vmem>>, vector<16x1xf32>
    %cst_68 = arith.constant dense<0.000000e+00> : vector<1x1xf32>
    %142 = tpu.matmul %140, %141, %cst_68 {dimension_numbers = #tpu.dot_dimension_numbers<[1], [0], [0], [1], [0, 0, 1, 1], [], []>} : vector<1x16xf32>, vector<16x1xf32>, vector<1x1xf32> -> vector<1x1xf32>
    %c0_69 = arith.constant 0 : index
    %c0_70 = arith.constant 0 : index
    %143 = vector.load %arg16[%c0_69, %c0_70] : memref<1x1xf32, #tpu.memory_space<vmem>>, vector<1x1xf32>
    %144 = arith.addf %142, %143 : vector<1x1xf32>
    %145 = arith.negf %144 : vector<1x1xf32>
    %146 = math.exp %145 : vector<1x1xf32>
    %cst_71 = arith.constant 1.000000e+00 : f32
    %147 = vector.broadcast %cst_71 : f32 to vector<1x1xf32>
    %148 = arith.addf %147, %146 : vector<1x1xf32>
    %149 = arith.divf %147, %148 : vector<1x1xf32>
    %150 = vector.shape_cast %149 : vector<1x1xf32> to vector<1x1x1xf32>
    %c0_72 = arith.constant 0 : index
    %c0_73 = arith.constant 0 : index
    %c0_74 = arith.constant 0 : index
    %151 = vector.load %arg17[%c0_72, %c0_73, %c0_74] : memref<1x1x1xf32, #tpu.memory_space<vmem>>, vector<1x1x1xf32>
    tpu.vector_store %arg17[%c0_72, %c0_73, %c0_74], %150 {strides = array<i32>} : memref<1x1x1xf32, #tpu.memory_space<vmem>>, vector<1x1x1xf32>,
    return
  }
  func.func @transform_0(%arg0: i32) -> (i32, i32, i32) {
    %c0_i32 = arith.constant 0 : i32
    %c0_i32_0 = arith.constant 0 : i32
    %c0_i32_1 = arith.constant 0 : i32
    return %arg0, %c0_i32, %c0_i32_0 : i32, i32, i32
  }
  func.func @transform_1(%arg0: i32) -> (i32, i32) {
    %c0_i32 = arith.constant 0 : i32
    %c0_i32_0 = arith.constant 0 : i32
    %c0_i32_1 = arith.constant 0 : i32
    return %c0_i32, %c0_i32_0 : i32, i32
  }
  func.func @transform_2(%arg0: i32) -> (i32, i32) {
    %c0_i32 = arith.constant 0 : i32
    %c0_i32_0 = arith.constant 0 : i32
    %c0_i32_1 = arith.constant 0 : i32
    return %c0_i32, %c0_i32_0 : i32, i32
  }
  func.func @transform_3(%arg0: i32) -> (i32, i32) {
    %c0_i32 = arith.constant 0 : i32
    %c0_i32_0 = arith.constant 0 : i32
    %c0_i32_1 = arith.constant 0 : i32
    return %c0_i32, %c0_i32_0 : i32, i32
  }
  func.func @transform_4(%arg0: i32) -> (i32, i32) {
    %c0_i32 = arith.constant 0 : i32
    %c0_i32_0 = arith.constant 0 : i32
    %c0_i32_1 = arith.constant 0 : i32
    return %c0_i32, %c0_i32_0 : i32, i32
  }
  func.func @transform_5(%arg0: i32) -> (i32, i32) {
    %c0_i32 = arith.constant 0 : i32
    %c0_i32_0 = arith.constant 0 : i32
    %c0_i32_1 = arith.constant 0 : i32
    return %c0_i32, %c0_i32_0 : i32, i32
  }
  func.func @transform_6(%arg0: i32) -> (i32, i32) {
    %c0_i32 = arith.constant 0 : i32
    %c0_i32_0 = arith.constant 0 : i32
    %c0_i32_1 = arith.constant 0 : i32
    return %c0_i32, %c0_i32_0 : i32, i32
  }
  func.func @transform_7(%arg0: i32) -> (i32, i32) {
    %c0_i32 = arith.constant 0 : i32
    %c0_i32_0 = arith.constant 0 : i32
    %c0_i32_1 = arith.constant 0 : i32
    return %c0_i32, %c0_i32_0 : i32, i32
  }
  func.func @transform_8(%arg0: i32) -> (i32, i32) {
    %c0_i32 = arith.constant 0 : i32
    %c0_i32_0 = arith.constant 0 : i32
    %c0_i32_1 = arith.constant 0 : i32
    return %c0_i32, %c0_i32_0 : i32, i32
  }
  func.func @transform_9(%arg0: i32) -> (i32, i32) {
    %c0_i32 = arith.constant 0 : i32
    %c0_i32_0 = arith.constant 0 : i32
    %c0_i32_1 = arith.constant 0 : i32
    return %c0_i32, %c0_i32_0 : i32, i32
  }
  func.func @transform_10(%arg0: i32) -> (i32, i32) {
    %c0_i32 = arith.constant 0 : i32
    %c0_i32_0 = arith.constant 0 : i32
    %c0_i32_1 = arith.constant 0 : i32
    return %c0_i32, %c0_i32_0 : i32, i32
  }
  func.func @transform_11(%arg0: i32) -> (i32, i32) {
    %c0_i32 = arith.constant 0 : i32
    %c0_i32_0 = arith.constant 0 : i32
    %c0_i32_1 = arith.constant 0 : i32
    return %c0_i32, %c0_i32_0 : i32, i32
  }
  func.func @transform_12(%arg0: i32) -> (i32, i32) {
    %c0_i32 = arith.constant 0 : i32
    %c0_i32_0 = arith.constant 0 : i32
    %c0_i32_1 = arith.constant 0 : i32
    return %c0_i32, %c0_i32_0 : i32, i32
  }
  func.func @transform_13(%arg0: i32) -> (i32, i32) {
    %c0_i32 = arith.constant 0 : i32
    %c0_i32_0 = arith.constant 0 : i32
    %c0_i32_1 = arith.constant 0 : i32
    return %c0_i32, %c0_i32_0 : i32, i32
  }
  func.func @transform_14(%arg0: i32) -> (i32, i32) {
    %c0_i32 = arith.constant 0 : i32
    %c0_i32_0 = arith.constant 0 : i32
    %c0_i32_1 = arith.constant 0 : i32
    return %c0_i32, %c0_i32_0 : i32, i32
  }
  func.func @transform_15(%arg0: i32) -> (i32, i32) {
    %c0_i32 = arith.constant 0 : i32
    %c0_i32_0 = arith.constant 0 : i32
    %c0_i32_1 = arith.constant 0 : i32
    return %c0_i32, %c0_i32_0 : i32, i32
  }
  func.func @transform_16(%arg0: i32) -> (i32, i32, i32) {
    %c0_i32 = arith.constant 0 : i32
    %c0_i32_0 = arith.constant 0 : i32
    %c0_i32_1 = arith.constant 0 : i32
    return %arg0, %c0_i32, %c0_i32_0 : i32, i32, i32
  }
}

</mosaic_0001>

<llo_original>
// kernel: tpu_custom_call.1
$region0: #{tpu_custom_call.1}
  #allocation0 [shape = 'u32[]', space=smem, size = 0x4, offset = 0x4, fixed_abs, tag = 'smem constant byte address 0x4 - core index']
  #allocation1 [shape = 'u32[72,128]{1,0:T(1,128)}', space=vmem, size = 0x9000, scoped, tag = 'internal scratch']
  #allocation2 [shape = 'f32[1,1]{1,0:T(1,128)S(1)}', space=vmem, size = 0x200, scoped, tag = 'scoped memory for tpu_custom_call.1']
  #allocation3 [shape = 'f32[1,1]{1,0:T(1,128)S(1)}', space=vmem, size = 0x200, scoped, tag = 'scoped memory for tpu_custom_call.1']
  %s0 = inlined_call_operand.vmem [shape: f32[2,3,256], index: 0, kind: input, shape index: {}]
  %s1 = inlined_call_operand.vmem [shape: f32[9,256], index: 1, kind: input, shape index: {}]
  %s2 = inlined_call_operand.vmem [shape: f32[16,3], index: 2, kind: input, shape index: {}]
  %s3 = inlined_call_operand.vmem [shape: f32[16,1], index: 3, kind: input, shape index: {}]
  %s4 = inlined_call_operand.vmem [shape: f32[16,144], index: 4, kind: input, shape index: {}]
  %s5 = inlined_call_operand.vmem [shape: f32[16,1], index: 5, kind: input, shape index: {}]
  %s6 = inlined_call_operand.vmem [shape: f32[16,144], index: 6, kind: input, shape index: {}]
  %s7 = inlined_call_operand.vmem [shape: f32[16,1], index: 7, kind: input, shape index: {}]
  %s8 = inlined_call_operand.vmem [shape: f32[1,144], index: 8, kind: input, shape index: {}]
  %s9 = inlined_call_operand.<no memory space> [shape: f32[1,1], index: 9, kind: input, shape index: {}]
  %s10 = inlined_call_operand.vmem [shape: f32[256,32], index: 10, kind: input, shape index: {}]
  %s11 = inlined_call_operand.vmem [shape: f32[1,32], index: 11, kind: input, shape index: {}]
  %s12 = inlined_call_operand.vmem [shape: f32[32,16], index: 12, kind: input, shape index: {}]
  %s13 = inlined_call_operand.vmem [shape: f32[1,16], index: 13, kind: input, shape index: {}]
  %s14 = inlined_call_operand.vmem [shape: f32[16,1], index: 14, kind: input, shape index: {}]
  %s15 = inlined_call_operand.<no memory space> [shape: f32[1,1], index: 15, kind: input, shape index: {}]
  %s16 = inlined_call_operand.vmem [shape: f32[2,1,1], index: 16, kind: output, shape index: {}]
  %s17 = sld [smem:[#allocation0]]
  $region97: #{tpu_custom_call.1} parent=0
    _
  %s19 = ssub.s32 1, %s17
  %s20 = scalar_select 0, %s19, %s17
  %v21 = vstv %s9
  %22 = vst [vmem:[#allocation2] sm:$0x1] %v21
  %v23 = vstv %s15
  %24 = vst [vmem:[#allocation3] sm:$0x1] %v23
  loop: start=0, step=1, limit=4
  $region2: #{tpu_custom_call.1} parent=0 // loop_pre_header
    _
  $region3: #{tpu_custom_call.1} parent=0 // loop_header
    %s26 = sphi 0, %s30
    %p27 = scmp.ge.s32.totalorder %s26, 4
    %s36 = sphi 0, %s38
    %s39 = sphi 0, %s36
    %s40 = sphi 0, %s39
    %s56 = sphi 0, %s40
    %s60 = sphi 0, %s60
    %s62 = sphi 0, %s60
    %s63 = sphi 0, %s62
    %s77 = sphi 0, %s63
    %s81 = sphi 0, %s81
    %s83 = sphi 0, %s81
    %s84 = sphi 0, %s83
    %s98 = sphi 0, %s84
    %s102 = sphi 0, %s102
    %s104 = sphi 0, %s102
    %s105 = sphi 0, %s104
    %s119 = sphi 0, %s105
    %s123 = sphi 0, %s123
    %s125 = sphi 0, %s123
    %s126 = sphi 0, %s125
    %s140 = sphi 0, %s126
    %s144 = sphi 0, %s144
    %s146 = sphi 0, %s144
    %s147 = sphi 0, %s146
    %s161 = sphi 0, %s147
    %s165 = sphi 0, %s165
    %s167 = sphi 0, %s165
    %s168 = sphi 0, %s167
    %s182 = sphi 0, %s168
    %s186 = sphi 0, %s186
    %s188 = sphi 0, %s186
    %s189 = sphi 0, %s188
    %s203 = sphi 0, %s189
    %s207 = sphi 0, %s207
    %s209 = sphi 0, %s207
    %s210 = sphi 0, %s209
    %s224 = sphi 0, %s210
    %s228 = sphi 0, %s228
    %s230 = sphi 0, %s228
    %s231 = sphi 0, %s230
    %s245 = sphi 0, %s231
    %s249 = sphi 0, %s249
    %s251 = sphi 0, %s249
    %s252 = sphi 0, %s251
    %s266 = sphi 0, %s252
    %s270 = sphi 0, %s270
    %s272 = sphi 0, %s270
    %s273 = sphi 0, %s272
    %s287 = sphi 0, %s273
    %s291 = sphi 0, %s291
    %s293 = sphi 0, %s291
    %s294 = sphi 0, %s293
    %s308 = sphi 0, %s294
    %s312 = sphi 0, %s312
    %s314 = sphi 0, %s312
    %s315 = sphi 0, %s314
    %s329 = sphi 0, %s315
    %s333 = sphi 0, %s333
    %s335 = sphi 0, %s333
    %s336 = sphi 0, %s335
    %s350 = sphi 0, %s336
    %s354 = sphi 0, %s354
    %s356 = sphi 0, %s354
    %s357 = sphi 0, %s356
    %s371 = sphi 0, %s357
    %s377 = sphi 0, %s379
    %s380 = sphi 0, %s377
    %s381 = sphi 0, %s380
    %s397 = sphi 0, %s381
  $region4: #{tpu_custom_call.1} parent=0 // loop_header_branch
    %29 = sbr.rel (%p27) target = $region8
  $region5: #{tpu_custom_call.1} parent=0 // loop_body
    %s31 = ssub.s32 %s26, 1
    %s32 = ssub.s32 %s26, 2
    %s33 = sadd.s32 %s26, 1
    %s34 = ssub.s32 %s26, %s33
    %p35 = scmp.eq.s32.totalorder %s34, 0
    %s37 = sadd.s32 %s36, 1
    %s38 = scalar_select %p35, %s36, %s37
    %p41 = pneg %p35
    %p42 = scmp.eq.s32.totalorder %s26, 1
    %p43 = por %p41, %p42
    %p44 = scmp.ne.s32.totalorder %s36, %s39
    %p45 = scmp.eq.s32.totalorder %s26, 0
    %p46 = por %p44, %p45
    %p47 = scmp.ne.s32.totalorder %s36, %s39
    %p48 = scmp.eq.s32.totalorder %s31, 1
    %p49 = por %p47, %p48
    %p50 = scmp.ne.s32.totalorder %s39, %s40
    %p51 = scmp.eq.s32.totalorder %s31, 0
    %p52 = por %p50, %p51
    %p53 = scmp.ne.s32.totalorder %s39, %s40
    %p54 = scmp.eq.s32.totalorder %s32, 1
    %p55 = por %p53, %p54
    %p57 = scmp.ne.s32.totalorder %s40, %s56
    %p58 = scmp.eq.s32.totalorder %s32, 0
    %p59 = por %p57, %p58
    %s61 = sadd.s32 %s60, 1
    %p64 = scmp.eq.s32.totalorder %s26, 1
    %p65 = scmp.ne.s32.totalorder %s60, %s62
    %p66 = scmp.eq.s32.totalorder %s26, 0
    %p67 = por %p65, %p66
    %p68 = scmp.ne.s32.totalorder %s60, %s62
    %p69 = scmp.eq.s32.totalorder %s31, 1
    %p70 = por %p68, %p69
    %p71 = scmp.ne.s32.totalorder %s62, %s63
    %p72 = scmp.eq.s32.totalorder %s31, 0
    %p73 = por %p71, %p72
    %p74 = scmp.ne.s32.totalorder %s62, %s63
    %p75 = scmp.eq.s32.totalorder %s32, 1
    %p76 = por %p74, %p75
    %p78 = scmp.ne.s32.totalorder %s63, %s77
    %p79 = scmp.eq.s32.totalorder %s32, 0
    %p80 = por %p78, %p79
    %s82 = sadd.s32 %s81, 1
    %p85 = scmp.eq.s32.totalorder %s26, 1
    %p86 = scmp.ne.s32.totalorder %s81, %s83
    %p87 = scmp.eq.s32.totalorder %s26, 0
    %p88 = por %p86, %p87
    %p89 = scmp.ne.s32.totalorder %s81, %s83
    %p90 = scmp.eq.s32.totalorder %s31, 1
    %p91 = por %p89, %p90
    %p92 = scmp.ne.s32.totalorder %s83, %s84
    %p93 = scmp.eq.s32.totalorder %s31, 0
    %p94 = por %p92, %p93
    %p95 = scmp.ne.s32.totalorder %s83, %s84
    %p96 = scmp.eq.s32.totalorder %s32, 1
    %p97 = por %p95, %p96
    %p99 = scmp.ne.s32.totalorder %s84, %s98
    %p100 = scmp.eq.s32.totalorder %s32, 0
    %p101 = por %p99, %p100
    %s103 = sadd.s32 %s102, 1
    %p106 = scmp.eq.s32.totalorder %s26, 1
    %p107 = scmp.ne.s32.totalorder %s102, %s104
    %p108 = scmp.eq.s32.totalorder %s26, 0
    %p109 = por %p107, %p108
    %p110 = scmp.ne.s32.totalorder %s102, %s104
    %p111 = scmp.eq.s32.totalorder %s31, 1
    %p112 = por %p110, %p111
    %p113 = scmp.ne.s32.totalorder %s104, %s105
    %p114 = scmp.eq.s32.totalorder %s31, 0
    %p115 = por %p113, %p114
    %p116 = scmp.ne.s32.totalorder %s104, %s105
    %p117 = scmp.eq.s32.totalorder %s32, 1
    %p118 = por %p116, %p117
    %p120 = scmp.ne.s32.totalorder %s105, %s119
    %p121 = scmp.eq.s32.totalorder %s32, 0
    %p122 = por %p120, %p121
    %s124 = sadd.s32 %s123, 1
    %p127 = scmp.eq.s32.totalorder %s26, 1
    %p128 = scmp.ne.s32.totalorder %s123, %s125
    %p129 = scmp.eq.s32.totalorder %s26, 0
    %p130 = por %p128, %p129
    %p131 = scmp.ne.s32.totalorder %s123, %s125
    %p132 = scmp.eq.s32.totalorder %s31, 1
    %p133 = por %p131, %p132
    %p134 = scmp.ne.s32.totalorder %s125, %s126
    %p135 = scmp.eq.s32.totalorder %s31, 0
    %p136 = por %p134, %p135
    %p137 = scmp.ne.s32.totalorder %s125, %s126
    %p138 = scmp.eq.s32.totalorder %s32, 1
    %p139 = por %p137, %p138
    %p141 = scmp.ne.s32.totalorder %s126, %s140
    %p142 = scmp.eq.s32.totalorder %s32, 0
    %p143 = por %p141, %p142
    %s145 = sadd.s32 %s144, 1
    %p148 = scmp.eq.s32.totalorder %s26, 1
    %p149 = scmp.ne.s32.totalorder %s144, %s146
    %p150 = scmp.eq.s32.totalorder %s26, 0
    %p151 = por %p149, %p150
    %p152 = scmp.ne.s32.totalorder %s144, %s146
    %p153 = scmp.eq.s32.totalorder %s31, 1
    %p154 = por %p152, %p153
    %p155 = scmp.ne.s32.totalorder %s146, %s147
    %p156 = scmp.eq.s32.totalorder %s31, 0
    %p157 = por %p155, %p156
    %p158 = scmp.ne.s32.totalorder %s146, %s147
    %p159 = scmp.eq.s32.totalorder %s32, 1
    %p160 = por %p158, %p159
    %p162 = scmp.ne.s32.totalorder %s147, %s161
    %p163 = scmp.eq.s32.totalorder %s32, 0
    %p164 = por %p162, %p163
    %s166 = sadd.s32 %s165, 1
    %p169 = scmp.eq.s32.totalorder %s26, 1
    %p170 = scmp.ne.s32.totalorder %s165, %s167
    %p171 = scmp.eq.s32.totalorder %s26, 0
    %p172 = por %p170, %p171
    %p173 = scmp.ne.s32.totalorder %s165, %s167
    %p174 = scmp.eq.s32.totalorder %s31, 1
    %p175 = por %p173, %p174
    %p176 = scmp.ne.s32.totalorder %s167, %s168
    %p177 = scmp.eq.s32.totalorder %s31, 0
    %p178 = por %p176, %p177
    %p179 = scmp.ne.s32.totalorder %s167, %s168
    %p180 = scmp.eq.s32.totalorder %s32, 1
    %p181 = por %p179, %p180
    %p183 = scmp.ne.s32.totalorder %s168, %s182
    %p184 = scmp.eq.s32.totalorder %s32, 0
    %p185 = por %p183, %p184
    %s187 = sadd.s32 %s186, 1
    %p190 = scmp.eq.s32.totalorder %s26, 1
    %p191 = scmp.ne.s32.totalorder %s186, %s188
    %p192 = scmp.eq.s32.totalorder %s26, 0
    %p193 = por %p191, %p192
    %p194 = scmp.ne.s32.totalorder %s186, %s188
    %p195 = scmp.eq.s32.totalorder %s31, 1
    %p196 = por %p194, %p195
    %p197 = scmp.ne.s32.totalorder %s188, %s189
    %p198 = scmp.eq.s32.totalorder %s31, 0
    %p199 = por %p197, %p198
    %p200 = scmp.ne.s32.totalorder %s188, %s189
    %p201 = scmp.eq.s32.totalorder %s32, 1
    %p202 = por %p200, %p201
    %p204 = scmp.ne.s32.totalorder %s189, %s203
    %p205 = scmp.eq.s32.totalorder %s32, 0
    %p206 = por %p204, %p205
    %s208 = sadd.s32 %s207, 1
    %p211 = scmp.eq.s32.totalorder %s26, 1
    %p212 = scmp.ne.s32.totalorder %s207, %s209
    %p213 = scmp.eq.s32.totalorder %s26, 0
    %p214 = por %p212, %p213
    %p215 = scmp.ne.s32.totalorder %s207, %s209
    %p216 = scmp.eq.s32.totalorder %s31, 1
    %p217 = por %p215, %p216
    %p218 = scmp.ne.s32.totalorder %s209, %s210
    %p219 = scmp.eq.s32.totalorder %s31, 0
    %p220 = por %p218, %p219
    %p221 = scmp.ne.s32.totalorder %s209, %s210
    %p222 = scmp.eq.s32.totalorder %s32, 1
    %p223 = por %p221, %p222
    %p225 = scmp.ne.s32.totalorder %s210, %s224
    %p226 = scmp.eq.s32.totalorder %s32, 0
    %p227 = por %p225, %p226
    %s229 = sadd.s32 %s228, 1
    %p232 = scmp.eq.s32.totalorder %s26, 1
    %p233 = scmp.ne.s32.totalorder %s228, %s230
    %p234 = scmp.eq.s32.totalorder %s26, 0
    %p235 = por %p233, %p234
    %p236 = scmp.ne.s32.totalorder %s228, %s230
    %p237 = scmp.eq.s32.totalorder %s31, 1
    %p238 = por %p236, %p237
    %p239 = scmp.ne.s32.totalorder %s230, %s231
    %p240 = scmp.eq.s32.totalorder %s31, 0
    %p241 = por %p239, %p240
    %p242 = scmp.ne.s32.totalorder %s230, %s231
    %p243 = scmp.eq.s32.totalorder %s32, 1
    %p244 = por %p242, %p243
    %p246 = scmp.ne.s32.totalorder %s231, %s245
    %p247 = scmp.eq.s32.totalorder %s32, 0
    %p248 = por %p246, %p247
    %s250 = sadd.s32 %s249, 1
    %p253 = scmp.eq.s32.totalorder %s26, 1
    %p254 = scmp.ne.s32.totalorder %s249, %s251
    %p255 = scmp.eq.s32.totalorder %s26, 0
    %p256 = por %p254, %p255
    %p257 = scmp.ne.s32.totalorder %s249, %s251
    %p258 = scmp.eq.s32.totalorder %s31, 1
    %p259 = por %p257, %p258
    %p260 = scmp.ne.s32.totalorder %s251, %s252
    %p261 = scmp.eq.s32.totalorder %s31, 0
    %p262 = por %p260, %p261
    %p263 = scmp.ne.s32.totalorder %s251, %s252
    %p264 = scmp.eq.s32.totalorder %s32, 1
    %p265 = por %p263, %p264
    %p267 = scmp.ne.s32.totalorder %s252, %s266
    %p268 = scmp.eq.s32.totalorder %s32, 0
    %p269 = por %p267, %p268
    %s271 = sadd.s32 %s270, 1
    %p274 = scmp.eq.s32.totalorder %s26, 1
    %p275 = scmp.ne.s32.totalorder %s270, %s272
    %p276 = scmp.eq.s32.totalorder %s26, 0
    %p277 = por %p275, %p276
    %p278 = scmp.ne.s32.totalorder %s270, %s272
    %p279 = scmp.eq.s32.totalorder %s31, 1
    %p280 = por %p278, %p279
    %p281 = scmp.ne.s32.totalorder %s272, %s273
    %p282 = scmp.eq.s32.totalorder %s31, 0
    %p283 = por %p281, %p282
    %p284 = scmp.ne.s32.totalorder %s272, %s273
    %p285 = scmp.eq.s32.totalorder %s32, 1
    %p286 = por %p284, %p285
    %p288 = scmp.ne.s32.totalorder %s273, %s287
    %p289 = scmp.eq.s32.totalorder %s32, 0
    %p290 = por %p288, %p289
    %s292 = sadd.s32 %s291, 1
    %p295 = scmp.eq.s32.totalorder %s26, 1
    %p296 = scmp.ne.s32.totalorder %s291, %s293
    %p297 = scmp.eq.s32.totalorder %s26, 0
    %p298 = por %p296, %p297
    %p299 = scmp.ne.s32.totalorder %s291, %s293
    %p300 = scmp.eq.s32.totalorder %s31, 1
    %p301 = por %p299, %p300
    %p302 = scmp.ne.s32.totalorder %s293, %s294
    %p303 = scmp.eq.s32.totalorder %s31, 0
    %p304 = por %p302, %p303
    %p305 = scmp.ne.s32.totalorder %s293, %s294
    %p306 = scmp.eq.s32.totalorder %s32, 1
    %p307 = por %p305, %p306
    %p309 = scmp.ne.s32.totalorder %s294, %s308
    %p310 = scmp.eq.s32.totalorder %s32, 0
    %p311 = por %p309, %p310
    %s313 = sadd.s32 %s312, 1
    %p316 = scmp.eq.s32.totalorder %s26, 1
    %p317 = scmp.ne.s32.totalorder %s312, %s314
    %p318 = scmp.eq.s32.totalorder %s26, 0
    %p319 = por %p317, %p318
    %p320 = scmp.ne.s32.totalorder %s312, %s314
    %p321 = scmp.eq.s32.totalorder %s31, 1
    %p322 = por %p320, %p321
    %p323 = scmp.ne.s32.totalorder %s314, %s315
    %p324 = scmp.eq.s32.totalorder %s31, 0
    %p325 = por %p323, %p324
    %p326 = scmp.ne.s32.totalorder %s314, %s315
    %p327 = scmp.eq.s32.totalorder %s32, 1
    %p328 = por %p326, %p327
    %p330 = scmp.ne.s32.totalorder %s315, %s329
    %p331 = scmp.eq.s32.totalorder %s32, 0
    %p332 = por %p330, %p331
    %s334 = sadd.s32 %s333, 1
    %p337 = scmp.eq.s32.totalorder %s26, 1
    %p338 = scmp.ne.s32.totalorder %s333, %s335
    %p339 = scmp.eq.s32.totalorder %s26, 0
    %p340 = por %p338, %p339
    %p341 = scmp.ne.s32.totalorder %s333, %s335
    %p342 = scmp.eq.s32.totalorder %s31, 1
    %p343 = por %p341, %p342
    %p344 = scmp.ne.s32.totalorder %s335, %s336
    %p345 = scmp.eq.s32.totalorder %s31, 0
    %p346 = por %p344, %p345
    %p347 = scmp.ne.s32.totalorder %s335, %s336
    %p348 = scmp.eq.s32.totalorder %s32, 1
    %p349 = por %p347, %p348
    %p351 = scmp.ne.s32.totalorder %s336, %s350
    %p352 = scmp.eq.s32.totalorder %s32, 0
    %p353 = por %p351, %p352
    %s355 = sadd.s32 %s354, 1
    %p358 = scmp.eq.s32.totalorder %s26, 1
    %p359 = scmp.ne.s32.totalorder %s354, %s356
    %p360 = scmp.eq.s32.totalorder %s26, 0
    %p361 = por %p359, %p360
    %p362 = scmp.ne.s32.totalorder %s354, %s356
    %p363 = scmp.eq.s32.totalorder %s31, 1
    %p364 = por %p362, %p363
    %p365 = scmp.ne.s32.totalorder %s356, %s357
    %p366 = scmp.eq.s32.totalorder %s31, 0
    %p367 = por %p365, %p366
    %p368 = scmp.ne.s32.totalorder %s356, %s357
    %p369 = scmp.eq.s32.totalorder %s32, 1
    %p370 = por %p368, %p369
    %p372 = scmp.ne.s32.totalorder %s357, %s371
    %p373 = scmp.eq.s32.totalorder %s32, 0
    %p374 = por %p372, %p373
    %s375 = ssub.s32 %s26, %s33
    %p376 = scmp.eq.s32.totalorder %s375, 0
    %s378 = sadd.s32 %s377, 1
    %s379 = scalar_select %p376, %s377, %s378
    %p382 = pneg %p376
    %p383 = scmp.eq.s32.totalorder %s26, 1
    %p384 = por %p382, %p383
    %p385 = scmp.ne.s32.totalorder %s377, %s380
    %p386 = scmp.eq.s32.totalorder %s26, 0
    %p387 = por %p385, %p386
    %p388 = scmp.ne.s32.totalorder %s377, %s380
    %p389 = scmp.eq.s32.totalorder %s31, 1
    %p390 = por %p388, %p389
    %p391 = scmp.ne.s32.totalorder %s380, %s381
    %p392 = scmp.eq.s32.totalorder %s31, 0
    %p393 = por %p391, %p392
    %p394 = scmp.ne.s32.totalorder %s380, %s381
    %p395 = scmp.eq.s32.totalorder %s32, 1
    %p396 = por %p394, %p395
    %p398 = scmp.ne.s32.totalorder %s381, %s397
    %p399 = scmp.eq.s32.totalorder %s32, 0
    %p400 = por %p398, %p399
    %p401 = scmp.le.s32.totalorder 1, %s26
    %p402 = scmp.lt.s32.totalorder %s26, 3
    %p403 = pnand %p401, %p402
    %p404 = pneg %p403
    // Predicated region
    $region9: #{tpu_custom_call.1} parent=5 // pred_check
      _
    $region10: #{tpu_custom_call.1} parent=5 // pred_check_branch
      %406 = sbr.rel (%p403) target = $region12
    $region11: #{tpu_custom_call.1} parent=5 // pred_region
      %s407 = ssub.s32 %s26, 1
      // Predicated region
      $region13: #{tpu_custom_call.1} parent=11 // pred_check
        %p408 = pneg %p73
      $region14: #{tpu_custom_call.1} parent=11 // pred_check_branch
        %410 = sbr.rel (%p408) target = $region16
      $region15: #{tpu_custom_call.1} parent=11 // pred_region
        _
      $region16: #{tpu_custom_call.1} parent=11 // pred_fallthru
        _
      // Predicated region
      $region17: #{tpu_custom_call.1} parent=11 // pred_check
        %p411 = pneg %p94
      $region18: #{tpu_custom_call.1} parent=11 // pred_check_branch
        %413 = sbr.rel (%p411) target = $region20
      $region19: #{tpu_custom_call.1} parent=11 // pred_region
        _
      $region20: #{tpu_custom_call.1} parent=11 // pred_fallthru
        _
      // Predicated region
      $region21: #{tpu_custom_call.1} parent=11 // pred_check
        %p414 = pneg %p115
      $region22: #{tpu_custom_call.1} parent=11 // pred_check_branch
        %416 = sbr.rel (%p414) target = $region24
      $region23: #{tpu_custom_call.1} parent=11 // pred_region
        _
      $region24: #{tpu_custom_call.1} parent=11 // pred_fallthru
        _
      // Predicated region
      $region25: #{tpu_custom_call.1} parent=11 // pred_check
        %p417 = pneg %p136
      $region26: #{tpu_custom_call.1} parent=11 // pred_check_branch
        %419 = sbr.rel (%p417) target = $region28
      $region27: #{tpu_custom_call.1} parent=11 // pred_region
        _
      $region28: #{tpu_custom_call.1} parent=11 // pred_fallthru
        _
      // Predicated region
      $region29: #{tpu_custom_call.1} parent=11 // pred_check
        %p420 = pneg %p157
      $region30: #{tpu_custom_call.1} parent=11 // pred_check_branch
        %422 = sbr.rel (%p420) target = $region32
      $region31: #{tpu_custom_call.1} parent=11 // pred_region
        _
      $region32: #{tpu_custom_call.1} parent=11 // pred_fallthru
        _
      // Predicated region
      $region33: #{tpu_custom_call.1} parent=11 // pred_check
        %p423 = pneg %p178
      $region34: #{tpu_custom_call.1} parent=11 // pred_check_branch
        %425 = sbr.rel (%p423) target = $region36
      $region35: #{tpu_custom_call.1} parent=11 // pred_region
        _
      $region36: #{tpu_custom_call.1} parent=11 // pred_fallthru
        _
      // Predicated region
      $region37: #{tpu_custom_call.1} parent=11 // pred_check
        %p426 = pneg %p199
      $region38: #{tpu_custom_call.1} parent=11 // pred_check_branch
        %428 = sbr.rel (%p426) target = $region40
      $region39: #{tpu_custom_call.1} parent=11 // pred_region
        _
      $region40: #{tpu_custom_call.1} parent=11 // pred_fallthru
        _
      // Predicated region
      $region41: #{tpu_custom_call.1} parent=11 // pred_check
        %p429 = pneg %p220
      $region42: #{tpu_custom_call.1} parent=11 // pred_check_branch
        %431 = sbr.rel (%p429) target = $region44
      $region43: #{tpu_custom_call.1} parent=11 // pred_region
        _
      $region44: #{tpu_custom_call.1} parent=11 // pred_fallthru
        _
      // Predicated region
      $region45: #{tpu_custom_call.1} parent=11 // pred_check
        %p432 = pneg %p241
      $region46: #{tpu_custom_call.1} parent=11 // pred_check_branch
        %434 = sbr.rel (%p432) target = $region48
      $region47: #{tpu_custom_call.1} parent=11 // pred_region
        _
      $region48: #{tpu_custom_call.1} parent=11 // pred_fallthru
        _
      // Predicated region
      $region49: #{tpu_custom_call.1} parent=11 // pred_check
        %p435 = pneg %p262
      $region50: #{tpu_custom_call.1} parent=11 // pred_check_branch
        %437 = sbr.rel (%p435) target = $region52
      $region51: #{tpu_custom_call.1} parent=11 // pred_region
        _
      $region52: #{tpu_custom_call.1} parent=11 // pred_fallthru
        _
      // Predicated region
      $region53: #{tpu_custom_call.1} parent=11 // pred_check
        %p438 = pneg %p283
      $region54: #{tpu_custom_call.1} parent=11 // pred_check_branch
        %440 = sbr.rel (%p438) target = $region56
      $region55: #{tpu_custom_call.1} parent=11 // pred_region
        _
      $region56: #{tpu_custom_call.1} parent=11 // pred_fallthru
        _
      // Predicated region
      $region57: #{tpu_custom_call.1} parent=11 // pred_check
        %p441 = pneg %p304
      $region58: #{tpu_custom_call.1} parent=11 // pred_check_branch
        %443 = sbr.rel (%p441) target = $region60
      $region59: #{tpu_custom_call.1} parent=11 // pred_region
        _
      $region60: #{tpu_custom_call.1} parent=11 // pred_fallthru
        _
      // Predicated region
      $region61: #{tpu_custom_call.1} parent=11 // pred_check
        %p444 = pneg %p325
      $region62: #{tpu_custom_call.1} parent=11 // pred_check_branch
        %446 = sbr.rel (%p444) target = $region64
      $region63: #{tpu_custom_call.1} parent=11 // pred_region
        _
      $region64: #{tpu_custom_call.1} parent=11 // pred_fallthru
        _
      // Predicated region
      $region65: #{tpu_custom_call.1} parent=11 // pred_check
        %p447 = pneg %p346
      $region66: #{tpu_custom_call.1} parent=11 // pred_check_branch
        %449 = sbr.rel (%p447) target = $region68
      $region67: #{tpu_custom_call.1} parent=11 // pred_region
        _
      $region68: #{tpu_custom_call.1} parent=11 // pred_fallthru
        _
      // Predicated region
      $region69: #{tpu_custom_call.1} parent=11 // pred_check
        %p450 = pneg %p367
      $region70: #{tpu_custom_call.1} parent=11 // pred_check_branch
        %452 = sbr.rel (%p450) target = $region72
      $region71: #{tpu_custom_call.1} parent=11 // pred_region
        _
      $region72: #{tpu_custom_call.1} parent=11 // pred_fallthru
        _
    $region12: #{tpu_custom_call.1} parent=5 // pred_fallthru
      _
    %p453 = scmp.lt.s32.totalorder %s26, 2
    // Predicated region
    $region73: #{tpu_custom_call.1} parent=5 // pred_check
      %p454 = pneg %p453
    $region74: #{tpu_custom_call.1} parent=5 // pred_check_branch
      %456 = sbr.rel (%p454) target = $region76
    $region75: #{tpu_custom_call.1} parent=5 // pred_region
      // Predicated region
      $region77: #{tpu_custom_call.1} parent=75 // pred_check
        %p457 = pneg %p46
      $region78: #{tpu_custom_call.1} parent=75 // pred_check_branch
        %459 = sbr.rel (%p457) target = $region80
      $region79: #{tpu_custom_call.1} parent=75 // pred_region
        %p460 = scmp.lt.s32.totalorder %s26, 1
        %s461 = scalar_select %p460, %s26, 1
        %s462 = smul.addr %s461, 2
        %s463 = smul.addr %s462, 4
        %s464 = scalar_lea.vmem %s0, %s463
      $region80: #{tpu_custom_call.1} parent=75 // pred_fallthru
        _
    $region76: #{tpu_custom_call.1} parent=5 // pred_fallthru
      _
    %p465 = scmp.le.s32.totalorder 1, %s26
    %p466 = scmp.lt.s32.totalorder %s26, 3
    %p467 = pnand %p465, %p466
    %p468 = pneg %p467
    // Predicated region
    $region81: #{tpu_custom_call.1} parent=5 // pred_check
      _
    $region82: #{tpu_custom_call.1} parent=5 // pred_check_branch
      %470 = sbr.rel (%p467) target = $region84
    $region83: #{tpu_custom_call.1} parent=5 // pred_region
      %s471 = ssub.s32 %s26, 1
      %p472 = scmp.lt.s32.totalorder %s31, 1
      %s473 = scalar_select %p472, %s31, 1
      %s474 = smul.addr %s473, 2
      %s475 = smul.addr %s474, 4
      %s476 = scalar_lea.vmem %s0, %s475
      %p477 = pneg %p52
      %p478 = pneg %p49
      %p479 = pneg %p73
      %p480 = pneg %p70
      %p481 = pneg %p94
      %p482 = pneg %p91
      %p483 = pneg %p115
      %p484 = pneg %p112
      %p485 = pneg %p136
      %p486 = pneg %p133
      %p487 = pneg %p157
      %p488 = pneg %p154
      %p489 = pneg %p178
      %p490 = pneg %p175
      %p491 = pneg %p199
      %p492 = pneg %p196
      %p493 = pneg %p220
      %p494 = pneg %p217
      %p495 = pneg %p241
      %p496 = pneg %p238
      %p497 = pneg %p262
      %p498 = pneg %p259
      %p499 = pneg %p283
      %p500 = pneg %p280
      %p501 = pneg %p304
      %p502 = pneg %p301
      %p503 = pneg %p325
      %p504 = pneg %p322
      %p505 = pneg %p346
      %p506 = pneg %p343
      %p507 = pneg %p367
      %p508 = pneg %p364
      %p509 = pneg %p393
      %p510 = pneg %p390
      %p511 = scmp.lt.s32.totalorder %s31, 1
      %s512 = scalar_select %p511, %s31, 1
      %s513 = scalar_lea.vmem %s16, %s512
      %p514 = scmp.lt.s32.totalorder %s31, 1
      %s515 = scalar_select %p514, %s31, 1
      %s516 = smul.addr %s515, 2
      %s517 = smul.addr %s516, 4
      %s518 = scalar_lea.vmem %s0, %s517
      %p519 = scmp.lt.s32.totalorder %s31, 1
      %s520 = scalar_select %p519, %s31, 1
      %s521 = scalar_lea.vmem %s16, %s520
      %v522 = vld [vmem:[%s518] sm:$0x77]
      %v523 = vld [vmem:[%s1] ss:$8 sm:$0x3]
      %s524 = scalar_lea.vmem %s1, 1
      %v525 = vld [vmem:[%s524] ss:$8 sm:$0x3]
      %s526 = scalar_lea.vmem %s1, 2
      %v527 = vld [vmem:[%s526] ss:$8 sm:$0x3]
      %s528 = scalar_lea.vmem %s1, 3
      %v529 = vld [vmem:[%s528] ss:$8 sm:$0x3]
      %s530 = scalar_lea.vmem %s1, 4
      %v531 = vld [vmem:[%s530] ss:$8 sm:$0x3]
      %s532 = scalar_lea.vmem %s1, 5
      %v533 = vld [vmem:[%s532] ss:$8 sm:$0x3]
      %s534 = scalar_lea.vmem %s1, 6
      %v535 = vld [vmem:[%s534] ss:$8 sm:$0x3]
      %s536 = scalar_lea.vmem %s1, 7
      %v537 = vld [vmem:[%s536] ss:$8 sm:$0x3]
      %s538 = scalar_lea.vmem %s1, 16
      %v539 = vld [vmem:[%s538] ss:$8 sm:$0x3]
      %v540 = vld [vmem:[%s2] sm:$0xff]
      %v541 = vld [vmem:[%s2 + $0x8] sm:$0xff]
      %v542 = vld [vmem:[%s3] sm:$0xff]
      %v543 = vld [vmem:[%s3 + $0x8] sm:$0xff]
      %545 = vset.pattern.permute.xlu0 0
      %546 = vperm.xlu0 %545, %v542
      %v547 = vpop.permute.xlu0 %546
      %550 = vset.pattern.permute.xlu0 0
      %551 = vperm.xlu0 %550, %v543
      %v552 = vpop.permute.xlu0 %551
      %555 = vst [vmem:[#allocation1] ss:$2 sm:$0xff] %v522
      %v556 = vld.sshfl [vmem:[#allocation1] sm:$0xff pattern:$0x75316420]
      %v557 = vld.sshfl [vmem:[#allocation1 + $0x8] sm:$0xff pattern:$0x75316420]
      %vm558 = vcmask 23552
      %v560 = vsel %vm558, %v540, 0
      %v563 = vsel %vm558, %v541, 0
      %vm565 = vcmask 1042432
      %v566 = vsel %vm565, %v556, 0
      %v568 = vsel %vm565, %v557, 0
      %570 = vmatpush.msra.mxu0 0.0
      %571 = vmatpush.msra.mxu0 0.0
      %572 = vmatpush.msra.mxu0 0.0
      %573 = vmatpush.msra.mxu0 0.0
      %574 = vmatpush.msra.mxu0 0.0
      %575 = vmatpush.msra.mxu0 0.0
      %576 = vmatpush.msra.mxu0 0.0
      %577 = vmatpush.msra.mxu0 0.0
      %578 = vmatpush.msra.mxu0 0.0
      %579 = vmatpush.msra.mxu0 0.0
      %580 = vmatpush.msra.mxu0 0.0
      %581 = vmatpush.msra.mxu0 0.0
      %582 = vmatpush.msra.mxu0 0.0
      %583 = vmatpush.msra.mxu0 0.0
      %584 = vmatpush.msra.mxu0 0.0
      %585 = vmatpush.msra.mxu0 %v566
      %586 = vmatmul.f32.gmra.mxu0 %v560
      %v587 = vpop.f32.mrf.mxu0
      %v588 = vadd.f32 %v547, %v587
      %589 = vmatmul.f32.gmra.mxu0 %v563
      %v590 = vpop.f32.mrf.mxu0
      %v591 = vadd.f32 %v552, %v590
      %592 = vdwg.mxu0
      %593 = vmatpush.msra.mxu0 0.0
      %594 = vmatpush.msra.mxu0 0.0
      %595 = vmatpush.msra.mxu0 0.0
      %596 = vmatpush.msra.mxu0 0.0
      %597 = vmatpush.msra.mxu0 0.0
      %598 = vmatpush.msra.mxu0 0.0
      %599 = vmatpush.msra.mxu0 0.0
      %600 = vmatpush.msra.mxu0 0.0
      %601 = vmatpush.msra.mxu0 0.0
      %602 = vmatpush.msra.mxu0 0.0
      %603 = vmatpush.msra.mxu0 0.0
      %604 = vmatpush.msra.mxu0 0.0
      %605 = vmatpush.msra.mxu0 0.0
      %606 = vmatpush.msra.mxu0 0.0
      %607 = vmatpush.msra.mxu0 0.0
      %608 = vmatpush.msra.mxu0 %v568
      %609 = vmatmul.f32.gmra.mxu0 %v560
      %v610 = vpop.f32.mrf.mxu0
      %v611 = vadd.f32 %v547, %v610
      %612 = vmatmul.f32.gmra.mxu0 %v563
      %v613 = vpop.f32.mrf.mxu0
      %v614 = vadd.f32 %v552, %v613
      %615 = vdwg.mxu0
      %vm616 = vcmp.gt.f32.partialorder %v588, 0.0
      %vm617 = vcmp.gt.f32.partialorder %v611, 0.0
      %vm618 = vcmp.gt.f32.partialorder %v591, 0.0
      %vm619 = vcmp.gt.f32.partialorder %v614, 0.0
      %v620 = vmul.f32 %v588, 0.01
      %v621 = vmul.f32 %v611, 0.01
      %v622 = vmul.f32 %v591, 0.01
      %v623 = vmul.f32 %v614, 0.01
      %v624 = vsel %vm616, %v588, %v620
      %v625 = vsel %vm617, %v611, %v621
      %v626 = vsel %vm618, %v591, %v622
      %v627 = vsel %vm619, %v614, %v623
      %628 = vrot.lane.b32.xlu0 %v624, 17
      %v629 = vpop.permute.xlu0 %628
      %630 = vrot.lane.b32.xlu0 %v626, 17
      %v631 = vpop.permute.xlu0 %630
      %632 = vrot.lane.b32.xlu0 %v625, 17
      %v633 = vpop.permute.xlu0 %632
      %634 = vrot.lane.b32.xlu0 %v627, 17
      %v635 = vpop.permute.xlu0 %634
      %v636 = vlaneseq
      %v637 = vand.u32 %v636, 127
      %vm638 = vcmp.lt.s32.totalorder %v637, 17
      %v639 = vsel %vm638, %v629, %v633
      %v640 = vsel %vm638, %v631, %v635
      %v641 = vsel %vm638, %v633, %v629
      %v642 = vsel %vm638, %v635, %v631
      %v644 = vperm.slane %v523, 0
      %v645 = vperm.slane %v523, 1
      %v648 = vmul.f32 %v641, %v644
      %v649 = vmul.f32 %v639, %v645
      %v650 = vmul.f32 %v642, %v644
      %v651 = vmul.f32 %v640, %v645
      %652 = vrot.lane.b32.xlu0 %v624, 16
      %v653 = vpop.permute.xlu0 %652
      %654 = vrot.lane.b32.xlu0 %v626, 16
      %v655 = vpop.permute.xlu0 %654
      %656 = vrot.lane.b32.xlu0 %v625, 16
      %v657 = vpop.permute.xlu0 %656
      %658 = vrot.lane.b32.xlu0 %v627, 16
      %v659 = vpop.permute.xlu0 %658
      %vm660 = vcmp.lt.s32.totalorder %v637, 16
      %v661 = vsel %vm660, %v653, %v657
      %v662 = vsel %vm660, %v655, %v659
      %v663 = vsel %vm660, %v657, %v653
      %v664 = vsel %vm660, %v659, %v655
      %v666 = vperm.slane %v525, 0
      %v667 = vperm.slane %v525, 1
      %v670 = vmul.f32 %v663, %v666
      %v671 = vmul.f32 %v661, %v667
      %v672 = vmul.f32 %v664, %v666
      %v673 = vmul.f32 %v662, %v667
      %674 = vrot.lane.b32.xlu0 %v624, 15
      %v675 = vpop.permute.xlu0 %674
      %676 = vrot.lane.b32.xlu0 %v626, 15
      %v677 = vpop.permute.xlu0 %676
      %678 = vrot.lane.b32.xlu0 %v625, 15
      %v679 = vpop.permute.xlu0 %678
      %680 = vrot.lane.b32.xlu0 %v627, 15
      %v681 = vpop.permute.xlu0 %680
      %vm682 = vcmp.lt.s32.totalorder %v637, 15
      %v683 = vsel %vm682, %v675, %v679
      %v684 = vsel %vm682, %v677, %v681
      %v685 = vsel %vm682, %v679, %v675
      %v686 = vsel %vm682, %v681, %v677
      %v688 = vperm.slane %v527, 0
      %v689 = vperm.slane %v527, 1
      %v692 = vmul.f32 %v685, %v688
      %v693 = vmul.f32 %v683, %v689
      %v694 = vmul.f32 %v686, %v688
      %v695 = vmul.f32 %v684, %v689
      %696 = vrot.lane.b32.xlu0 %v624, 1
      %v697 = vpop.permute.xlu0 %696
      %698 = vrot.lane.b32.xlu0 %v626, 1
      %v699 = vpop.permute.xlu0 %698
      %700 = vrot.lane.b32.xlu0 %v625, 1
      %v701 = vpop.permute.xlu0 %700
      %702 = vrot.lane.b32.xlu0 %v627, 1
      %v703 = vpop.permute.xlu0 %702
      %vm704 = vcmp.lt.s32.totalorder %v637, 1
      %v705 = vsel %vm704, %v697, %v701
      %v706 = vsel %vm704, %v699, %v703
      %v707 = vsel %vm704, %v701, %v697
      %v708 = vsel %vm704, %v703, %v699
      %v710 = vperm.slane %v529, 0
      %v711 = vperm.slane %v529, 1
      %v714 = vmul.f32 %v707, %v710
      %v715 = vmul.f32 %v705, %v711
      %v716 = vmul.f32 %v708, %v710
      %v717 = vmul.f32 %v706, %v711
      %v719 = vperm.slane %v531, 0
      %v720 = vperm.slane %v531, 1
      %v723 = vmul.f32 %v624, %v719
      %v724 = vmul.f32 %v625, %v720
      %v725 = vmul.f32 %v626, %v719
      %v726 = vmul.f32 %v627, %v720
      %727 = vrot.lane.b32.xlu0 %v624, 127
      %v728 = vpop.permute.xlu0 %727
      %729 = vrot.lane.b32.xlu0 %v626, 127
      %v730 = vpop.permute.xlu0 %729
      %731 = vrot.lane.b32.xlu0 %v625, 127
      %v732 = vpop.permute.xlu0 %731
      %733 = vrot.lane.b32.xlu0 %v627, 127
      %v734 = vpop.permute.xlu0 %733
      %vm735 = vcmp.lt.s32.totalorder %v637, 127
      %v736 = vsel %vm735, %v728, %v732
      %v737 = vsel %vm735, %v730, %v734
      %v738 = vsel %vm735, %v732, %v728
      %v739 = vsel %vm735, %v734, %v730
      %v741 = vperm.slane %v533, 0
      %v742 = vperm.slane %v533, 1
      %v745 = vmul.f32 %v736, %v741
      %v746 = vmul.f32 %v738, %v742
      %v747 = vmul.f32 %v737, %v741
      %v748 = vmul.f32 %v739, %v742
      %749 = vrot.lane.b32.xlu0 %v624, 113
      %v750 = vpop.permute.xlu0 %749
      %751 = vrot.lane.b32.xlu0 %v626, 113
      %v752 = vpop.permute.xlu0 %751
      %753 = vrot.lane.b32.xlu0 %v625, 113
      %v754 = vpop.permute.xlu0 %753
      %755 = vrot.lane.b32.xlu0 %v627, 113
      %v756 = vpop.permute.xlu0 %755
      %vm757 = vcmp.lt.s32.totalorder %v637, 113
      %v758 = vsel %vm757, %v750, %v754
      %v759 = vsel %vm757, %v752, %v756
      %v760 = vsel %vm757, %v754, %v750
      %v761 = vsel %vm757, %v756, %v752
      %v763 = vperm.slane %v535, 0
      %v764 = vperm.slane %v535, 1
      %v767 = vmul.f32 %v758, %v763
      %v768 = vmul.f32 %v760, %v764
      %v769 = vmul.f32 %v759, %v763
      %v770 = vmul.f32 %v761, %v764
      %771 = vrot.lane.b32.xlu0 %v624, 112
      %v772 = vpop.permute.xlu0 %771
      %773 = vrot.lane.b32.xlu0 %v626, 112
      %v774 = vpop.permute.xlu0 %773
      %775 = vrot.lane.b32.xlu0 %v625, 112
      %v776 = vpop.permute.xlu0 %775
      %777 = vrot.lane.b32.xlu0 %v627, 112
      %v778 = vpop.permute.xlu0 %777
      %vm779 = vcmp.lt.s32.totalorder %v637, 112
      %v780 = vsel %vm779, %v772, %v776
      %v781 = vsel %vm779, %v774, %v778
      %v782 = vsel %vm779, %v776, %v772
      %v783 = vsel %vm779, %v778, %v774
      %v785 = vperm.slane %v537, 0
      %v786 = vperm.slane %v537, 1
      %v789 = vmul.f32 %v780, %v785
      %v790 = vmul.f32 %v782, %v786
      %v791 = vmul.f32 %v781, %v785
      %v792 = vmul.f32 %v783, %v786
      %793 = vrot.lane.b32.xlu0 %v624, 111
      %v794 = vpop.permute.xlu0 %793
      %795 = vrot.lane.b32.xlu0 %v626, 111
      %v796 = vpop.permute.xlu0 %795
      %797 = vrot.lane.b32.xlu0 %v625, 111
      %v798 = vpop.permute.xlu0 %797
      %799 = vrot.lane.b32.xlu0 %v627, 111
      %v800 = vpop.permute.xlu0 %799
      %vm801 = vcmp.lt.s32.totalorder %v637, 111
      %v802 = vsel %vm801, %v794, %v798
      %v803 = vsel %vm801, %v796, %v800
      %v804 = vsel %vm801, %v798, %v794
      %v805 = vsel %vm801, %v800, %v796
      %v807 = vperm.slane %v539, 0
      %v808 = vperm.slane %v539, 1
      %v811 = vmul.f32 %v802, %v807
      %v812 = vmul.f32 %v804, %v808
      %v813 = vmul.f32 %v803, %v807
      %v814 = vmul.f32 %v805, %v808
      %v815 = vld [vmem:[%s4] sm:$0xff]
      %v816 = vld [vmem:[%s4 + $0x8] sm:$0xff]
      %v817 = vld [vmem:[%s4 + $0x10] sm:$0xff]
      %v818 = vld [vmem:[%s4 + $0x18] sm:$0xff]
      %v819 = vld [vmem:[%s5] sm:$0xff]
      %v820 = vld [vmem:[%s5 + $0x8] sm:$0xff]
      %822 = vset.pattern.permute.xlu0 0
      %823 = vperm.xlu0 %822, %v819
      %v824 = vpop.permute.xlu0 %823
      %827 = vset.pattern.permute.xlu0 0
      %828 = vperm.xlu0 %827, %v820
      %v829 = vpop.permute.xlu0 %828
      %vm831 = vcmask 130048
      %v833 = vsel %vm831, %v816, 0
      %v836 = vsel %vm831, %v818, 0
      %838 = vmatpush.msra.mxu0 %v791
      %839 = vmatpush.msra.mxu0 %v789
      %840 = vmatpush.msra.mxu0 %v769
      %841 = vmatpush.msra.mxu0 %v767
      %842 = vmatpush.msra.mxu0 %v747
      %843 = vmatpush.msra.mxu0 %v745
      %844 = vmatpush.msra.mxu0 %v725
      %845 = vmatpush.msra.mxu0 %v723
      %846 = vmatpush.msra.mxu0 %v716
      %847 = vmatpush.msra.mxu0 %v714
      %848 = vmatpush.msra.mxu0 %v694
      %849 = vmatpush.msra.mxu0 %v692
      %850 = vmatpush.msra.mxu0 %v672
      %851 = vmatpush.msra.mxu0 %v670
      %852 = vmatpush.msra.mxu0 %v650
      %853 = vmatpush.msra.mxu0 %v648
      %854 = vmatmul.f32.gmra.mxu0 %v815
      %v855 = vpop.f32.mrf.mxu0
      %v856 = vadd.f32 %v824, %v855
      %857 = vmatmul.f32.gmra.mxu0 %v817
      %v858 = vpop.f32.mrf.mxu0
      %v859 = vadd.f32 %v829, %v858
      %860 = vdwg.mxu0
      %861 = vmatpush.msra.mxu0 0.0
      %862 = vmatpush.msra.mxu0 0.0
      %863 = vmatpush.msra.mxu0 0.0
      %864 = vmatpush.msra.mxu0 0.0
      %865 = vmatpush.msra.mxu0 0.0
      %866 = vmatpush.msra.mxu0 0.0
      %867 = vmatpush.msra.mxu0 0.0
      %868 = vmatpush.msra.mxu0 0.0
      %869 = vmatpush.msra.mxu0 0.0
      %870 = vmatpush.msra.mxu0 0.0
      %871 = vmatpush.msra.mxu0 0.0
      %872 = vmatpush.msra.mxu0 0.0
      %873 = vmatpush.msra.mxu0 0.0
      %874 = vmatpush.msra.mxu0 0.0
      %875 = vmatpush.msra.mxu0 %v813
      %876 = vmatpush.msra.mxu0 %v811
      %877 = vmatmul.f32.gmra.mxu0 %v833
      %v878 = vpop.f32.mrf.mxu0
      %v879 = vadd.f32 %v856, %v878
      %880 = vmatmul.f32.gmra.mxu0 %v836
      %v881 = vpop.f32.mrf.mxu0
      %v882 = vadd.f32 %v859, %v881
      %883 = vdwg.mxu0
      %884 = vmatpush.msra.mxu0 %v792
      %885 = vmatpush.msra.mxu0 %v790
      %886 = vmatpush.msra.mxu0 %v770
      %887 = vmatpush.msra.mxu0 %v768
      %888 = vmatpush.msra.mxu0 %v748
      %889 = vmatpush.msra.mxu0 %v746
      %890 = vmatpush.msra.mxu0 %v726
      %891 = vmatpush.msra.mxu0 %v724
      %892 = vmatpush.msra.mxu0 %v717
      %893 = vmatpush.msra.mxu0 %v715
      %894 = vmatpush.msra.mxu0 %v695
      %895 = vmatpush.msra.mxu0 %v693
      %896 = vmatpush.msra.mxu0 %v673
      %897 = vmatpush.msra.mxu0 %v671
      %898 = vmatpush.msra.mxu0 %v651
      %899 = vmatpush.msra.mxu0 %v649
      %900 = vmatmul.f32.gmra.mxu0 %v815
      %v901 = vpop.f32.mrf.mxu0
      %v902 = vadd.f32 %v824, %v901
      %903 = vmatmul.f32.gmra.mxu0 %v817
      %v904 = vpop.f32.mrf.mxu0
      %v905 = vadd.f32 %v829, %v904
      %906 = vdwg.mxu0
      %907 = vmatpush.msra.mxu0 0.0
      %908 = vmatpush.msra.mxu0 0.0
      %909 = vmatpush.msra.mxu0 0.0
      %910 = vmatpush.msra.mxu0 0.0
      %911 = vmatpush.msra.mxu0 0.0
      %912 = vmatpush.msra.mxu0 0.0
      %913 = vmatpush.msra.mxu0 0.0
      %914 = vmatpush.msra.mxu0 0.0
      %915 = vmatpush.msra.mxu0 0.0
      %916 = vmatpush.msra.mxu0 0.0
      %917 = vmatpush.msra.mxu0 0.0
      %918 = vmatpush.msra.mxu0 0.0
      %919 = vmatpush.msra.mxu0 0.0
      %920 = vmatpush.msra.mxu0 0.0
      %921 = vmatpush.msra.mxu0 %v814
      %922 = vmatpush.msra.mxu0 %v812
      %923 = vmatmul.f32.gmra.mxu0 %v833
      %v924 = vpop.f32.mrf.mxu0
      %v925 = vadd.f32 %v902, %v924
      %926 = vmatmul.f32.gmra.mxu0 %v836
      %v927 = vpop.f32.mrf.mxu0
      %v928 = vadd.f32 %v905, %v927
      %929 = vdwg.mxu0
      %vm930 = vcmp.gt.f32.partialorder %v879, 0.0
      %vm931 = vcmp.gt.f32.partialorder %v925, 0.0
      %vm932 = vcmp.gt.f32.partialorder %v882, 0.0
      %vm933 = vcmp.gt.f32.partialorder %v928, 0.0
      %v934 = vmul.f32 %v879, 0.01
      %v935 = vmul.f32 %v925, 0.01
      %v936 = vmul.f32 %v882, 0.01
      %v937 = vmul.f32 %v928, 0.01
      %v938 = vsel %vm930, %v879, %v934
      %v939 = vsel %vm931, %v925, %v935
      %v940 = vsel %vm932, %v882, %v936
      %v941 = vsel %vm933, %v928, %v937
      %942 = vrot.lane.b32.xlu0 %v938, 17
      %v943 = vpop.permute.xlu0 %942
      %944 = vrot.lane.b32.xlu0 %v940, 17
      %v945 = vpop.permute.xlu0 %944
      %946 = vrot.lane.b32.xlu0 %v939, 17
      %v947 = vpop.permute.xlu0 %946
      %948 = vrot.lane.b32.xlu0 %v941, 17
      %v949 = vpop.permute.xlu0 %948
      %v950 = vsel %vm638, %v943, %v947
      %v951 = vsel %vm638, %v945, %v949
      %v952 = vsel %vm638, %v947, %v943
      %v953 = vsel %vm638, %v949, %v945
      %v954 = vmul.f32 %v952, %v644
      %v955 = vmul.f32 %v950, %v645
      %v956 = vmul.f32 %v953, %v644
      %v957 = vmul.f32 %v951, %v645
      %958 = vrot.lane.b32.xlu0 %v938, 16
      %v959 = vpop.permute.xlu0 %958
      %960 = vrot.lane.b32.xlu0 %v940, 16
      %v961 = vpop.permute.xlu0 %960
      %962 = vrot.lane.b32.xlu0 %v939, 16
      %v963 = vpop.permute.xlu0 %962
      %964 = vrot.lane.b32.xlu0 %v941, 16
      %v965 = vpop.permute.xlu0 %964
      %v966 = vsel %vm660, %v959, %v963
      %v967 = vsel %vm660, %v961, %v965
      %v968 = vsel %vm660, %v963, %v959
      %v969 = vsel %vm660, %v965, %v961
      %v970 = vmul.f32 %v968, %v666
      %v971 = vmul.f32 %v966, %v667
      %v972 = vmul.f32 %v969, %v666
      %v973 = vmul.f32 %v967, %v667
      %974 = vrot.lane.b32.xlu0 %v938, 15
      %v975 = vpop.permute.xlu0 %974
      %976 = vrot.lane.b32.xlu0 %v940, 15
      %v977 = vpop.permute.xlu0 %976
      %978 = vrot.lane.b32.xlu0 %v939, 15
      %v979 = vpop.permute.xlu0 %978
      %980 = vrot.lane.b32.xlu0 %v941, 15
      %v981 = vpop.permute.xlu0 %980
      %v982 = vsel %vm682, %v975, %v979
      %v983 = vsel %vm682, %v977, %v981
      %v984 = vsel %vm682, %v979, %v975
      %v985 = vsel %vm682, %v981, %v977
      %v986 = vmul.f32 %v984, %v688
      %v987 = vmul.f32 %v982, %v689
      %v988 = vmul.f32 %v985, %v688
      %v989 = vmul.f32 %v983, %v689
      %990 = vrot.lane.b32.xlu0 %v938, 1
      %v991 = vpop.permute.xlu0 %990
      %992 = vrot.lane.b32.xlu0 %v940, 1
      %v993 = vpop.permute.xlu0 %992
      %994 = vrot.lane.b32.xlu0 %v939, 1
      %v995 = vpop.permute.xlu0 %994
      %996 = vrot.lane.b32.xlu0 %v941, 1
      %v997 = vpop.permute.xlu0 %996
      %v998 = vsel %vm704, %v991, %v995
      %v999 = vsel %vm704, %v993, %v997
      %v1000 = vsel %vm704, %v995, %v991
      %v1001 = vsel %vm704, %v997, %v993
      %v1002 = vmul.f32 %v1000, %v710
      %v1003 = vmul.f32 %v998, %v711
      %v1004 = vmul.f32 %v1001, %v710
      %v1005 = vmul.f32 %v999, %v711
      %v1006 = vmul.f32 %v938, %v719
      %v1007 = vmul.f32 %v939, %v720
      %v1008 = vmul.f32 %v940, %v719
      %v1009 = vmul.f32 %v941, %v720
      %1010 = vrot.lane.b32.xlu0 %v938, 127
      %v1011 = vpop.permute.xlu0 %1010
      %1012 = vrot.lane.b32.xlu0 %v940, 127
      %v1013 = vpop.permute.xlu0 %1012
      %1014 = vrot.lane.b32.xlu0 %v939, 127
      %v1015 = vpop.permute.xlu0 %1014
      %1016 = vrot.lane.b32.xlu0 %v941, 127
      %v1017 = vpop.permute.xlu0 %1016
      %v1018 = vsel %vm735, %v1011, %v1015
      %v1019 = vsel %vm735, %v1013, %v1017
      %v1020 = vsel %vm735, %v1015, %v1011
      %v1021 = vsel %vm735, %v1017, %v1013
      %v1022 = vmul.f32 %v1018, %v741
      %v1023 = vmul.f32 %v1020, %v742
      %v1024 = vmul.f32 %v1019, %v741
      %v1025 = vmul.f32 %v1021, %v742
      %1026 = vrot.lane.b32.xlu0 %v938, 113
      %v1027 = vpop.permute.xlu0 %1026
      %1028 = vrot.lane.b32.xlu0 %v940, 113
      %v1029 = vpop.permute.xlu0 %1028
      %1030 = vrot.lane.b32.xlu0 %v939, 113
      %v1031 = vpop.permute.xlu0 %1030
      %1032 = vrot.lane.b32.xlu0 %v941, 113
      %v1033 = vpop.permute.xlu0 %1032
      %v1034 = vsel %vm757, %v1027, %v1031
      %v1035 = vsel %vm757, %v1029, %v1033
      %v1036 = vsel %vm757, %v1031, %v1027
      %v1037 = vsel %vm757, %v1033, %v1029
      %v1038 = vmul.f32 %v1034, %v763
      %v1039 = vmul.f32 %v1036, %v764
      %v1040 = vmul.f32 %v1035, %v763
      %v1041 = vmul.f32 %v1037, %v764
      %1042 = vrot.lane.b32.xlu0 %v938, 112
      %v1043 = vpop.permute.xlu0 %1042
      %1044 = vrot.lane.b32.xlu0 %v940, 112
      %v1045 = vpop.permute.xlu0 %1044
      %1046 = vrot.lane.b32.xlu0 %v939, 112
      %v1047 = vpop.permute.xlu0 %1046
      %1048 = vrot.lane.b32.xlu0 %v941, 112
      %v1049 = vpop.permute.xlu0 %1048
      %v1050 = vsel %vm779, %v1043, %v1047
      %v1051 = vsel %vm779, %v1045, %v1049
      %v1052 = vsel %vm779, %v1047, %v1043
      %v1053 = vsel %vm779, %v1049, %v1045
      %v1054 = vmul.f32 %v1050, %v785
      %v1055 = vmul.f32 %v1052, %v786
      %v1056 = vmul.f32 %v1051, %v785
      %v1057 = vmul.f32 %v1053, %v786
      %1058 = vrot.lane.b32.xlu0 %v938, 111
      %v1059 = vpop.permute.xlu0 %1058
      %1060 = vrot.lane.b32.xlu0 %v940, 111
      %v1061 = vpop.permute.xlu0 %1060
      %1062 = vrot.lane.b32.xlu0 %v939, 111
      %v1063 = vpop.permute.xlu0 %1062
      %1064 = vrot.lane.b32.xlu0 %v941, 111
      %v1065 = vpop.permute.xlu0 %1064
      %v1066 = vsel %vm801, %v1059, %v1063
      %v1067 = vsel %vm801, %v1061, %v1065
      %v1068 = vsel %vm801, %v1063, %v1059
      %v1069 = vsel %vm801, %v1065, %v1061
      %v1070 = vmul.f32 %v1066, %v807
      %v1071 = vmul.f32 %v1068, %v808
      %v1072 = vmul.f32 %v1067, %v807
      %v1073 = vmul.f32 %v1069, %v808
      %v1074 = vld [vmem:[%s6] sm:$0xff]
      %v1075 = vld [vmem:[%s6 + $0x8] sm:$0xff]
      %v1076 = vld [vmem:[%s6 + $0x10] sm:$0xff]
      %v1077 = vld [vmem:[%s6 + $0x18] sm:$0xff]
      %v1078 = vld [vmem:[%s7] sm:$0xff]
      %v1079 = vld [vmem:[%s7 + $0x8] sm:$0xff]
      %1081 = vset.pattern.permute.xlu0 0
      %1082 = vperm.xlu0 %1081, %v1078
      %v1083 = vpop.permute.xlu0 %1082
      %1086 = vset.pattern.permute.xlu0 0
      %1087 = vperm.xlu0 %1086, %v1079
      %v1088 = vpop.permute.xlu0 %1087
      %v1091 = vsel %vm831, %v1075, 0
      %v1094 = vsel %vm831, %v1077, 0
      %1096 = vmatpush.msra.mxu0 %v1056
      %1097 = vmatpush.msra.mxu0 %v1054
      %1098 = vmatpush.msra.mxu0 %v1040
      %1099 = vmatpush.msra.mxu0 %v1038
      %1100 = vmatpush.msra.mxu0 %v1024
      %1101 = vmatpush.msra.mxu0 %v1022
      %1102 = vmatpush.msra.mxu0 %v1008
      %1103 = vmatpush.msra.mxu0 %v1006
      %1104 = vmatpush.msra.mxu0 %v1004
      %1105 = vmatpush.msra.mxu0 %v1002
      %1106 = vmatpush.msra.mxu0 %v988
      %1107 = vmatpush.msra.mxu0 %v986
      %1108 = vmatpush.msra.mxu0 %v972
      %1109 = vmatpush.msra.mxu0 %v970
      %1110 = vmatpush.msra.mxu0 %v956
      %1111 = vmatpush.msra.mxu0 %v954
      %1112 = vmatmul.f32.gmra.mxu0 %v1074
      %v1113 = vpop.f32.mrf.mxu0
      %v1114 = vadd.f32 %v1083, %v1113
      %1115 = vmatmul.f32.gmra.mxu0 %v1076
      %v1116 = vpop.f32.mrf.mxu0
      %v1117 = vadd.f32 %v1088, %v1116
      %1118 = vdwg.mxu0
      %1119 = vmatpush.msra.mxu0 0.0
      %1120 = vmatpush.msra.mxu0 0.0
      %1121 = vmatpush.msra.mxu0 0.0
      %1122 = vmatpush.msra.mxu0 0.0
      %1123 = vmatpush.msra.mxu0 0.0
      %1124 = vmatpush.msra.mxu0 0.0
      %1125 = vmatpush.msra.mxu0 0.0
      %1126 = vmatpush.msra.mxu0 0.0
      %1127 = vmatpush.msra.mxu0 0.0
      %1128 = vmatpush.msra.mxu0 0.0
      %1129 = vmatpush.msra.mxu0 0.0
      %1130 = vmatpush.msra.mxu0 0.0
      %1131 = vmatpush.msra.mxu0 0.0
      %1132 = vmatpush.msra.mxu0 0.0
      %1133 = vmatpush.msra.mxu0 %v1072
      %1134 = vmatpush.msra.mxu0 %v1070
      %1135 = vmatmul.f32.gmra.mxu0 %v1091
      %v1136 = vpop.f32.mrf.mxu0
      %v1137 = vadd.f32 %v1114, %v1136
      %1138 = vmatmul.f32.gmra.mxu0 %v1094
      %v1139 = vpop.f32.mrf.mxu0
      %v1140 = vadd.f32 %v1117, %v1139
      %1141 = vdwg.mxu0
      %1142 = vmatpush.msra.mxu0 %v1057
      %1143 = vmatpush.msra.mxu0 %v1055
      %1144 = vmatpush.msra.mxu0 %v1041
      %1145 = vmatpush.msra.mxu0 %v1039
      %1146 = vmatpush.msra.mxu0 %v1025
      %1147 = vmatpush.msra.mxu0 %v1023
      %1148 = vmatpush.msra.mxu0 %v1009
      %1149 = vmatpush.msra.mxu0 %v1007
      %1150 = vmatpush.msra.mxu0 %v1005
      %1151 = vmatpush.msra.mxu0 %v1003
      %1152 = vmatpush.msra.mxu0 %v989
      %1153 = vmatpush.msra.mxu0 %v987
      %1154 = vmatpush.msra.mxu0 %v973
      %1155 = vmatpush.msra.mxu0 %v971
      %1156 = vmatpush.msra.mxu0 %v957
      %1157 = vmatpush.msra.mxu0 %v955
      %1158 = vmatmul.f32.gmra.mxu0 %v1074
      %v1159 = vpop.f32.mrf.mxu0
      %v1160 = vadd.f32 %v1083, %v1159
      %1161 = vmatmul.f32.gmra.mxu0 %v1076
      %v1162 = vpop.f32.mrf.mxu0
      %v1163 = vadd.f32 %v1088, %v1162
      %1164 = vdwg.mxu0
      %1165 = vmatpush.msra.mxu0 0.0
      %1166 = vmatpush.msra.mxu0 0.0
      %1167 = vmatpush.msra.mxu0 0.0
      %1168 = vmatpush.msra.mxu0 0.0
      %1169 = vmatpush.msra.mxu0 0.0
      %1170 = vmatpush.msra.mxu0 0.0
      %1171 = vmatpush.msra.mxu0 0.0
      %1172 = vmatpush.msra.mxu0 0.0
      %1173 = vmatpush.msra.mxu0 0.0
      %1174 = vmatpush.msra.mxu0 0.0
      %1175 = vmatpush.msra.mxu0 0.0
      %1176 = vmatpush.msra.mxu0 0.0
      %1177 = vmatpush.msra.mxu0 0.0
      %1178 = vmatpush.msra.mxu0 0.0
      %1179 = vmatpush.msra.mxu0 %v1073
      %1180 = vmatpush.msra.mxu0 %v1071
      %1181 = vmatmul.f32.gmra.mxu0 %v1091
      %v1182 = vpop.f32.mrf.mxu0
      %v1183 = vadd.f32 %v1160, %v1182
      %1184 = vmatmul.f32.gmra.mxu0 %v1094
      %v1185 = vpop.f32.mrf.mxu0
      %v1186 = vadd.f32 %v1163, %v1185
      %1187 = vdwg.mxu0
      %vm1188 = vcmp.gt.f32.partialorder %v1137, 0.0
      %vm1189 = vcmp.gt.f32.partialorder %v1183, 0.0
      %vm1190 = vcmp.gt.f32.partialorder %v1140, 0.0
      %vm1191 = vcmp.gt.f32.partialorder %v1186, 0.0
      %v1192 = vmul.f32 %v1137, 0.01
      %v1193 = vmul.f32 %v1183, 0.01
      %v1194 = vmul.f32 %v1140, 0.01
      %v1195 = vmul.f32 %v1186, 0.01
      %v1196 = vsel %vm1188, %v1137, %v1192
      %v1197 = vsel %vm1189, %v1183, %v1193
      %v1198 = vsel %vm1190, %v1140, %v1194
      %v1199 = vsel %vm1191, %v1186, %v1195
      %1200 = vrot.lane.b32.xlu0 %v1196, 17
      %v1201 = vpop.permute.xlu0 %1200
      %1202 = vrot.lane.b32.xlu0 %v1198, 17
      %v1203 = vpop.permute.xlu0 %1202
      %1204 = vrot.lane.b32.xlu0 %v1197, 17
      %v1205 = vpop.permute.xlu0 %1204
      %1206 = vrot.lane.b32.xlu0 %v1199, 17
      %v1207 = vpop.permute.xlu0 %1206
      %v1208 = vsel %vm638, %v1201, %v1205
      %v1209 = vsel %vm638, %v1203, %v1207
      %v1210 = vsel %vm638, %v1205, %v1201
      %v1211 = vsel %vm638, %v1207, %v1203
      %v1212 = vmul.f32 %v1210, %v644
      %v1213 = vmul.f32 %v1208, %v645
      %v1214 = vmul.f32 %v1211, %v644
      %v1215 = vmul.f32 %v1209, %v645
      %1216 = vrot.lane.b32.xlu0 %v1196, 16
      %v1217 = vpop.permute.xlu0 %1216
      %1218 = vrot.lane.b32.xlu0 %v1198, 16
      %v1219 = vpop.permute.xlu0 %1218
      %1220 = vrot.lane.b32.xlu0 %v1197, 16
      %v1221 = vpop.permute.xlu0 %1220
      %1222 = vrot.lane.b32.xlu0 %v1199, 16
      %v1223 = vpop.permute.xlu0 %1222
      %v1224 = vsel %vm660, %v1217, %v1221
      %v1225 = vsel %vm660, %v1219, %v1223
      %v1226 = vsel %vm660, %v1221, %v1217
      %v1227 = vsel %vm660, %v1223, %v1219
      %v1228 = vmul.f32 %v1226, %v666
      %v1229 = vmul.f32 %v1224, %v667
      %v1230 = vmul.f32 %v1227, %v666
      %v1231 = vmul.f32 %v1225, %v667
      %1232 = vrot.lane.b32.xlu0 %v1196, 15
      %v1233 = vpop.permute.xlu0 %1232
      %1234 = vrot.lane.b32.xlu0 %v1198, 15
      %v1235 = vpop.permute.xlu0 %1234
      %1236 = vrot.lane.b32.xlu0 %v1197, 15
      %v1237 = vpop.permute.xlu0 %1236
      %1238 = vrot.lane.b32.xlu0 %v1199, 15
      %v1239 = vpop.permute.xlu0 %1238
      %v1240 = vsel %vm682, %v1233, %v1237
      %v1241 = vsel %vm682, %v1235, %v1239
      %v1242 = vsel %vm682, %v1237, %v1233
      %v1243 = vsel %vm682, %v1239, %v1235
      %v1244 = vmul.f32 %v1242, %v688
      %v1245 = vmul.f32 %v1240, %v689
      %v1246 = vmul.f32 %v1243, %v688
      %v1247 = vmul.f32 %v1241, %v689
      %1248 = vrot.lane.b32.xlu0 %v1196, 1
      %v1249 = vpop.permute.xlu0 %1248
      %1250 = vrot.lane.b32.xlu0 %v1198, 1
      %v1251 = vpop.permute.xlu0 %1250
      %1252 = vrot.lane.b32.xlu0 %v1197, 1
      %v1253 = vpop.permute.xlu0 %1252
      %1254 = vrot.lane.b32.xlu0 %v1199, 1
      %v1255 = vpop.permute.xlu0 %1254
      %v1256 = vsel %vm704, %v1249, %v1253
      %v1257 = vsel %vm704, %v1251, %v1255
      %v1258 = vsel %vm704, %v1253, %v1249
      %v1259 = vsel %vm704, %v1255, %v1251
      %v1260 = vmul.f32 %v1258, %v710
      %v1261 = vmul.f32 %v1256, %v711
      %v1262 = vmul.f32 %v1259, %v710
      %v1263 = vmul.f32 %v1257, %v711
      %v1264 = vmul.f32 %v1196, %v719
      %v1265 = vmul.f32 %v1197, %v720
      %v1266 = vmul.f32 %v1198, %v719
      %v1267 = vmul.f32 %v1199, %v720
      %1268 = vrot.lane.b32.xlu0 %v1196, 127
      %v1269 = vpop.permute.xlu0 %1268
      %1270 = vrot.lane.b32.xlu0 %v1198, 127
      %v1271 = vpop.permute.xlu0 %1270
      %1272 = vrot.lane.b32.xlu0 %v1197, 127
      %v1273 = vpop.permute.xlu0 %1272
      %1274 = vrot.lane.b32.xlu0 %v1199, 127
      %v1275 = vpop.permute.xlu0 %1274
      %v1276 = vsel %vm735, %v1269, %v1273
      %v1277 = vsel %vm735, %v1271, %v1275
      %v1278 = vsel %vm735, %v1273, %v1269
      %v1279 = vsel %vm735, %v1275, %v1271
      %v1280 = vmul.f32 %v1276, %v741
      %v1281 = vmul.f32 %v1278, %v742
      %v1282 = vmul.f32 %v1277, %v741
      %v1283 = vmul.f32 %v1279, %v742
      %1284 = vrot.lane.b32.xlu0 %v1196, 113
      %v1285 = vpop.permute.xlu0 %1284
      %1286 = vrot.lane.b32.xlu0 %v1198, 113
      %v1287 = vpop.permute.xlu0 %1286
      %1288 = vrot.lane.b32.xlu0 %v1197, 113
      %v1289 = vpop.permute.xlu0 %1288
      %1290 = vrot.lane.b32.xlu0 %v1199, 113
      %v1291 = vpop.permute.xlu0 %1290
      %v1292 = vsel %vm757, %v1285, %v1289
      %v1293 = vsel %vm757, %v1287, %v1291
      %v1294 = vsel %vm757, %v1289, %v1285
      %v1295 = vsel %vm757, %v1291, %v1287
      %v1296 = vmul.f32 %v1292, %v763
      %v1297 = vmul.f32 %v1294, %v764
      %v1298 = vmul.f32 %v1293, %v763
      %v1299 = vmul.f32 %v1295, %v764
      %1300 = vrot.lane.b32.xlu0 %v1196, 112
      %v1301 = vpop.permute.xlu0 %1300
      %1302 = vrot.lane.b32.xlu0 %v1198, 112
      %v1303 = vpop.permute.xlu0 %1302
      %1304 = vrot.lane.b32.xlu0 %v1197, 112
      %v1305 = vpop.permute.xlu0 %1304
      %1306 = vrot.lane.b32.xlu0 %v1199, 112
      %v1307 = vpop.permute.xlu0 %1306
      %v1308 = vsel %vm779, %v1301, %v1305
      %v1309 = vsel %vm779, %v1303, %v1307
      %v1310 = vsel %vm779, %v1305, %v1301
      %v1311 = vsel %vm779, %v1307, %v1303
      %v1312 = vmul.f32 %v1308, %v785
      %v1313 = vmul.f32 %v1310, %v786
      %v1314 = vmul.f32 %v1309, %v785
      %v1315 = vmul.f32 %v1311, %v786
      %1316 = vrot.lane.b32.xlu0 %v1196, 111
      %v1317 = vpop.permute.xlu0 %1316
      %1318 = vrot.lane.b32.xlu0 %v1198, 111
      %v1319 = vpop.permute.xlu0 %1318
      %1320 = vrot.lane.b32.xlu0 %v1197, 111
      %v1321 = vpop.permute.xlu0 %1320
      %1322 = vrot.lane.b32.xlu0 %v1199, 111
      %v1323 = vpop.permute.xlu0 %1322
      %v1324 = vsel %vm801, %v1317, %v1321
      %v1325 = vsel %vm801, %v1319, %v1323
      %v1326 = vsel %vm801, %v1321, %v1317
      %v1327 = vsel %vm801, %v1323, %v1319
      %v1328 = vmul.f32 %v1324, %v807
      %v1329 = vmul.f32 %v1326, %v808
      %v1330 = vmul.f32 %v1325, %v807
      %v1331 = vmul.f32 %v1327, %v808
      %v1332 = vld [vmem:[%s8] sm:$0x3]
      %v1333 = vld [vmem:[#allocation2] sm:$0x1]
      %1335 = vset.pattern.permute.xlu0 0
      %1336 = vperm.xlu0 %1335, %v1333
      %v1337 = vpop.permute.xlu0 %1336
      %v1339 = vperm.slane %v1337, 0
      %v1341 = vperm.slane %v1332, 0
      %v1342 = vperm.slane %v1332, 1
      %v1344 = vsel %vm831, %v1342, 0
      %1346 = vmatpush.msra.mxu0 %v1314
      %1347 = vmatpush.msra.mxu0 %v1312
      %1348 = vmatpush.msra.mxu0 %v1298
      %1349 = vmatpush.msra.mxu0 %v1296
      %1350 = vmatpush.msra.mxu0 %v1282
      %1351 = vmatpush.msra.mxu0 %v1280
      %1352 = vmatpush.msra.mxu0 %v1266
      %1353 = vmatpush.msra.mxu0 %v1264
      %1354 = vmatpush.msra.mxu0 %v1262
      %1355 = vmatpush.msra.mxu0 %v1260
      %1356 = vmatpush.msra.mxu0 %v1246
      %1357 = vmatpush.msra.mxu0 %v1244
      %1358 = vmatpush.msra.mxu0 %v1230
      %1359 = vmatpush.msra.mxu0 %v1228
      %1360 = vmatpush.msra.mxu0 %v1214
      %1361 = vmatpush.msra.mxu0 %v1212
      %1362 = vmatmul.f32.gmra.mxu0 %v1341
      %v1363 = vpop.f32.mrf.mxu0
      %v1364 = vadd.f32 %v1339, %v1363
      %1365 = vdwg.mxu0
      %1366 = vmatpush.msra.mxu0 0.0
      %1367 = vmatpush.msra.mxu0 0.0
      %1368 = vmatpush.msra.mxu0 0.0
      %1369 = vmatpush.msra.mxu0 0.0
      %1370 = vmatpush.msra.mxu0 0.0
      %1371 = vmatpush.msra.mxu0 0.0
      %1372 = vmatpush.msra.mxu0 0.0
      %1373 = vmatpush.msra.mxu0 0.0
      %1374 = vmatpush.msra.mxu0 0.0
      %1375 = vmatpush.msra.mxu0 0.0
      %1376 = vmatpush.msra.mxu0 0.0
      %1377 = vmatpush.msra.mxu0 0.0
      %1378 = vmatpush.msra.mxu0 0.0
      %1379 = vmatpush.msra.mxu0 0.0
      %1380 = vmatpush.msra.mxu0 %v1330
      %1381 = vmatpush.msra.mxu0 %v1328
      %1382 = vmatmul.f32.gmra.mxu0 %v1344
      %v1383 = vpop.f32.mrf.mxu0
      %v1384 = vadd.f32 %v1364, %v1383
      %1385 = vdwg.mxu0
      %1386 = vmatpush.msra.mxu0 %v1315
      %1387 = vmatpush.msra.mxu0 %v1313
      %1388 = vmatpush.msra.mxu0 %v1299
      %1389 = vmatpush.msra.mxu0 %v1297
      %1390 = vmatpush.msra.mxu0 %v1283
      %1391 = vmatpush.msra.mxu0 %v1281
      %1392 = vmatpush.msra.mxu0 %v1267
      %1393 = vmatpush.msra.mxu0 %v1265
      %1394 = vmatpush.msra.mxu0 %v1263
      %1395 = vmatpush.msra.mxu0 %v1261
      %1396 = vmatpush.msra.mxu0 %v1247
      %1397 = vmatpush.msra.mxu0 %v1245
      %1398 = vmatpush.msra.mxu0 %v1231
      %1399 = vmatpush.msra.mxu0 %v1229
      %1400 = vmatpush.msra.mxu0 %v1215
      %1401 = vmatpush.msra.mxu0 %v1213
      %1402 = vmatmul.f32.gmra.mxu0 %v1341
      %v1403 = vpop.f32.mrf.mxu0
      %v1404 = vadd.f32 %v1339, %v1403
      %1405 = vdwg.mxu0
      %1406 = vmatpush.msra.mxu0 0.0
      %1407 = vmatpush.msra.mxu0 0.0
      %1408 = vmatpush.msra.mxu0 0.0
      %1409 = vmatpush.msra.mxu0 0.0
      %1410 = vmatpush.msra.mxu0 0.0
      %1411 = vmatpush.msra.mxu0 0.0
      %1412 = vmatpush.msra.mxu0 0.0
      %1413 = vmatpush.msra.mxu0 0.0
      %1414 = vmatpush.msra.mxu0 0.0
      %1415 = vmatpush.msra.mxu0 0.0
      %1416 = vmatpush.msra.mxu0 0.0
      %1417 = vmatpush.msra.mxu0 0.0
      %1418 = vmatpush.msra.mxu0 0.0
      %1419 = vmatpush.msra.mxu0 0.0
      %1420 = vmatpush.msra.mxu0 %v1331
      %1421 = vmatpush.msra.mxu0 %v1329
      %1422 = vmatmul.f32.gmra.mxu0 %v1344
      %v1423 = vpop.f32.mrf.mxu0
      %v1424 = vadd.f32 %v1404, %v1423
      %1425 = vdwg.mxu0
      %v1426 = vmax.f32 %v1384, 0.0
      %v1427 = vmax.f32 %v1424, 0.0
      %v1428 = vld [vmem:[%s10] sm:$0xff]
      %v1429 = vld [vmem:[%s10 + $0x8] sm:$0xff]
      %v1430 = vld [vmem:[%s10 + $0x10] sm:$0xff]
      %v1431 = vld [vmem:[%s10 + $0x18] sm:$0xff]
      %v1432 = vld [vmem:[%s10 + $0x20] sm:$0xff]
      %v1433 = vld [vmem:[%s10 + $0x28] sm:$0xff]
      %v1434 = vld [vmem:[%s10 + $0x30] sm:$0xff]
      %v1435 = vld [vmem:[%s10 + $0x38] sm:$0xff]
      %v1436 = vld [vmem:[%s10 + $0x40] sm:$0xff]
      %v1437 = vld [vmem:[%s10 + $0x48] sm:$0xff]
      %v1438 = vld [vmem:[%s10 + $0x50] sm:$0xff]
      %v1439 = vld [vmem:[%s10 + $0x58] sm:$0xff]
      %v1440 = vld [vmem:[%s10 + $0x60] sm:$0xff]
      %v1441 = vld [vmem:[%s10 + $0x68] sm:$0xff]
      %v1442 = vld [vmem:[%s10 + $0x70] sm:$0xff]
      %v1443 = vld [vmem:[%s10 + $0x78] sm:$0xff]
      %v1444 = vld [vmem:[%s10 + $0x80] sm:$0xff]
      %v1445 = vld [vmem:[%s10 + $0x88] sm:$0xff]
      %v1446 = vld [vmem:[%s10 + $0x90] sm:$0xff]
      %v1447 = vld [vmem:[%s10 + $0x98] sm:$0xff]
      %v1448 = vld [vmem:[%s10 + $0xa0] sm:$0xff]
      %v1449 = vld [vmem:[%s10 + $0xa8] sm:$0xff]
      %v1450 = vld [vmem:[%s10 + $0xb0] sm:$0xff]
      %v1451 = vld [vmem:[%s10 + $0xb8] sm:$0xff]
      %v1452 = vld [vmem:[%s10 + $0xc0] sm:$0xff]
      %v1453 = vld [vmem:[%s10 + $0xc8] sm:$0xff]
      %v1454 = vld [vmem:[%s10 + $0xd0] sm:$0xff]
      %v1455 = vld [vmem:[%s10 + $0xd8] sm:$0xff]
      %v1456 = vld [vmem:[%s10 + $0xe0] sm:$0xff]
      %v1457 = vld [vmem:[%s10 + $0xe8] sm:$0xff]
      %v1458 = vld [vmem:[%s10 + $0xf0] sm:$0xff]
      %v1459 = vld [vmem:[%s10 + $0xf8] sm:$0xff]
      %v1460 = vld [vmem:[%s11] sm:$0x1]
      %1461 = vmatpush.msra.mxu0 %v1443
      %1462 = vmatpush.msra.mxu0 %v1442
      %1463 = vmatpush.msra.mxu0 %v1441
      %1464 = vmatpush.msra.mxu0 %v1440
      %1465 = vmatpush.msra.mxu0 %v1439
      %1466 = vmatpush.msra.mxu0 %v1438
      %1467 = vmatpush.msra.mxu0 %v1437
      %1468 = vmatpush.msra.mxu0 %v1436
      %1469 = vmatpush.msra.mxu0 %v1435
      %1470 = vmatpush.msra.mxu0 %v1434
      %1471 = vmatpush.msra.mxu0 %v1433
      %1472 = vmatpush.msra.mxu0 %v1432
      %1473 = vmatpush.msra.mxu0 %v1431
      %1474 = vmatpush.msra.mxu0 %v1430
      %1475 = vmatpush.msra.mxu0 %v1429
      %1476 = vmatpush.msra.mxu0 %v1428
      %1477 = vmatmul.f32.gmra.mxu0 %v1426
      %v1478 = vpop.f32.mrf.mxu0
      %v1479 = vadd.f32 %v1460, %v1478
      %1480 = vdwg.mxu0
      %1481 = vmatpush.msra.mxu0 %v1459
      %1482 = vmatpush.msra.mxu0 %v1458
      %1483 = vmatpush.msra.mxu0 %v1457
      %1484 = vmatpush.msra.mxu0 %v1456
      %1485 = vmatpush.msra.mxu0 %v1455
      %1486 = vmatpush.msra.mxu0 %v1454
      %1487 = vmatpush.msra.mxu0 %v1453
      %1488 = vmatpush.msra.mxu0 %v1452
      %1489 = vmatpush.msra.mxu0 %v1451
      %1490 = vmatpush.msra.mxu0 %v1450
      %1491 = vmatpush.msra.mxu0 %v1449
      %1492 = vmatpush.msra.mxu0 %v1448
      %1493 = vmatpush.msra.mxu0 %v1447
      %1494 = vmatpush.msra.mxu0 %v1446
      %1495 = vmatpush.msra.mxu0 %v1445
      %1496 = vmatpush.msra.mxu0 %v1444
      %1497 = vmatmul.f32.gmra.mxu0 %v1427
      %v1498 = vpop.f32.mrf.mxu0
      %v1499 = vadd.f32 %v1479, %v1498
      %1500 = vdwg.mxu0
      %v1501 = vmax.f32 %v1499, 0.0
      %v1502 = vld [vmem:[%s12] sm:$0xff]
      %v1503 = vld [vmem:[%s12 + $0x8] sm:$0xff]
      %v1504 = vld [vmem:[%s12 + $0x10] sm:$0xff]
      %v1505 = vld [vmem:[%s12 + $0x18] sm:$0xff]
      %v1506 = vld [vmem:[%s13] sm:$0x1]
      %vm1507 = vcmask 261120
      %v1509 = vsel %vm1507, %v1501, 0
      %1511 = vmatpush.msra.mxu0 0.0
      %1512 = vmatpush.msra.mxu0 0.0
      %1513 = vmatpush.msra.mxu0 0.0
      %1514 = vmatpush.msra.mxu0 0.0
      %1515 = vmatpush.msra.mxu0 0.0
      %1516 = vmatpush.msra.mxu0 0.0
      %1517 = vmatpush.msra.mxu0 0.0
      %1518 = vmatpush.msra.mxu0 0.0
      %1519 = vmatpush.msra.mxu0 0.0
      %1520 = vmatpush.msra.mxu0 0.0
      %1521 = vmatpush.msra.mxu0 0.0
      %1522 = vmatpush.msra.mxu0 0.0
      %1523 = vmatpush.msra.mxu0 %v1505
      %1524 = vmatpush.msra.mxu0 %v1504
      %1525 = vmatpush.msra.mxu0 %v1503
      %1526 = vmatpush.msra.mxu0 %v1502
      %1527 = vmatmul.f32.gmra.mxu0 %v1509
      %v1528 = vpop.f32.mrf.mxu0
      %v1529 = vadd.f32 %v1506, %v1528
      %1530 = vdwg.mxu0
      %v1531 = vmax.f32 %v1529, 0.0
      %v1532 = vld [vmem:[%s14] sm:$0xff]
      %v1533 = vld [vmem:[%s14 + $0x8] sm:$0xff]
      %v1534 = vld [vmem:[#allocation3] sm:$0x1]
      %v1536 = vsel %vm831, %v1531, 0
      %1538 = vmatpush.msra.mxu0 0.0
      %1539 = vmatpush.msra.mxu0 0.0
      %1540 = vmatpush.msra.mxu0 0.0
      %1541 = vmatpush.msra.mxu0 0.0
      %1542 = vmatpush.msra.mxu0 0.0
      %1543 = vmatpush.msra.mxu0 0.0
      %1544 = vmatpush.msra.mxu0 0.0
      %1545 = vmatpush.msra.mxu0 0.0
      %1546 = vmatpush.msra.mxu0 0.0
      %1547 = vmatpush.msra.mxu0 0.0
      %1548 = vmatpush.msra.mxu0 0.0
      %1549 = vmatpush.msra.mxu0 0.0
      %1550 = vmatpush.msra.mxu0 0.0
      %1551 = vmatpush.msra.mxu0 0.0
      %1552 = vmatpush.msra.mxu0 %v1533
      %1553 = vmatpush.msra.mxu0 %v1532
      %1554 = vmatmul.f32.gmra.mxu0 %v1536
      %v1555 = vpop.f32.mrf.mxu0
      %v1556 = vadd.f32 %v1534, %v1555
      %1557 = vdwg.mxu0
      %v1558 = vxor.u32 %v1556, 2147483648
      %v1559 = vmul.f32 %v1558, 1.442695
      %v1560 = vpow.pop %v1559
      %v1561 = vadd.f32 %v1560, 1.0
      %v1562 = vrcp.pop %v1561
      %v1563 = vmul.f32 %v1561, %v1562
      %v1564 = vsub.f32 1.0, %v1563
      %v1565 = vmul.f32 %v1562, %v1564
      %v1566 = vadd.f32 %v1562, %v1565
      %vm1567 = vweird.f32 %v1561
      %vm1568 = vweird.f32 %v1562
      %vm1569 = vmor %vm1567, %vm1568
      %v1570 = vsel %vm1569, %v1562, %v1566
      %v1571 = vand.u32 2147483647, %v1561
      %vm1572 = vcmp.eq.f32.partialorder %v1571, 8.507059e+37
      %v1573 = vand.u32 %v1561, 2147483648
      %v1574 = vor.u32 1.1754944e-38, %v1573
      %v1575 = vsel %vm1572, %v1574, %v1570
      %v1576 = vmul.f32 1.0, %v1575
      %vm1577 = vcmask 0
      %1578 = vst.msk [vmem:[%s521] sm:$0x1] %vm1577, %v1576
      %p1579 = scmp.lt.s32.totalorder %s31, 1
      %s1580 = scalar_select %p1579, %s31, 1
      %s1581 = scalar_lea.vmem %s16, %s1580
      // Predicated region
      $region85: #{tpu_custom_call.1} parent=83 // pred_check
        %p1582 = pneg %p390
      $region86: #{tpu_custom_call.1} parent=83 // pred_check_branch
        %1584 = sbr.rel (%p1582) target = $region88
      $region87: #{tpu_custom_call.1} parent=83 // pred_region
        _
      $region88: #{tpu_custom_call.1} parent=83 // pred_fallthru
        _
    $region84: #{tpu_custom_call.1} parent=5 // pred_fallthru
      _
    %p1585 = scmp.le.s32.totalorder 2, %s26
    // Predicated region
    $region89: #{tpu_custom_call.1} parent=5 // pred_check
      %p1586 = pneg %p1585
    $region90: #{tpu_custom_call.1} parent=5 // pred_check_branch
      %1588 = sbr.rel (%p1586) target = $region92
    $region91: #{tpu_custom_call.1} parent=5 // pred_region
      %s1589 = ssub.s32 %s26, 2
      // Predicated region
      $region93: #{tpu_custom_call.1} parent=91 // pred_check
        %p1590 = pneg %p396
      $region94: #{tpu_custom_call.1} parent=91 // pred_check_branch
        %1592 = sbr.rel (%p1590) target = $region96
      $region95: #{tpu_custom_call.1} parent=91 // pred_region
        %p1593 = scmp.lt.s32.totalorder %s32, 1
        %s1594 = scalar_select %p1593, %s32, 1
        %s1595 = scalar_lea.vmem %s16, %s1594
      $region96: #{tpu_custom_call.1} parent=91 // pred_fallthru
        _
    $region92: #{tpu_custom_call.1} parent=5 // pred_fallthru
      _
  $region6: #{tpu_custom_call.1} parent=0 // loop_footer
    %s30 = sadd.s32 1, %s26
  $region7: #{tpu_custom_call.1} parent=0 // loop_footer_branch
    %25 = sbr.rel target = $region3
  $region8: #{tpu_custom_call.1} parent=0 // loop_exit
    _

</llo_original>
